<compile_context>
chip_gen: v7x
topology: tpu7x:2x2x1
jax: 0.10.0
libtpu: 0.0.40
codegen_flags: <defaults>
</compile_context>

<pallas_src>
import functools

import jax
import jax.numpy as jnp
from jax.experimental import pallas as pl
from jax.experimental.pallas import tpu as pltpu

_MIB = 1 << 20
_MIN_GRID_STEPS = 8          # >= 4 grid steps per TensorCore on v7x megacore


# ----------------------------------------------------------------------------
# kernels
# ----------------------------------------------------------------------------
def _layernorm_kernel(x_ref, w_ref, b_ref, o_ref, *, eps):
    """Plain row-tiled LayerNorm.  x_ref: (tile_rows, C); w/b: (1, C) f32."""
    x = x_ref[...].astype(jnp.float32)
    mu = jnp.mean(x, axis=-1, keepdims=True)
    xc = x - mu
    var = jnp.mean(xc * xc, axis=-1, keepdims=True)      # unbiased=False
    inv = jax.lax.rsqrt(var + eps)                        # EUP, not VALU
    o_ref[...] = (xc * inv * w_ref[...] + b_ref[...]).astype(o_ref.dtype)


def _layernorm_packed_kernel(x_ref, p_ref, w_ref, b_ref, o_ref, *, eps):
    """Lane-dense LayerNorm for small C.

    x_ref: (tile_rows, 128) where each 128-lane row packs g = 128 // C
    original rows.  p_ref is the (128, 128) block-diagonal averaging matrix
    P[k, j] = 1/C if k // C == j // C else 0, so x @ P broadcasts each
    segment's mean to all of its lanes (1/C is a power of two -> the HIGHEST
    precision matmul is essentially exact).
    """
    x = x_ref[...].astype(jnp.float32)
    p = p_ref[...]
    mu = jnp.dot(x, p, preferred_element_type=jnp.float32,
                 precision=jax.lax.Precision.HIGHEST)
    xc = x - mu
    var = jnp.dot(xc * xc, p, preferred_element_type=jnp.float32,
                  precision=jax.lax.Precision.HIGHEST)
    inv = jax.lax.rsqrt(var + eps)
    o_ref[...] = (xc * inv * w_ref[...] + b_ref[...]).astype(o_ref.dtype)


# ----------------------------------------------------------------------------
# hardware / tiling helpers
# ----------------------------------------------------------------------------
def _round_up(x, m):
    return (x + m - 1) // m * m


def _sublanes(dtype):
    return {4: 8, 2: 16, 1: 32}.get(jnp.dtype(dtype).itemsize, 8)


def _vmem_capacity_bytes():
    """Per-core VMEM capacity; conservative 64 MiB (v7x per-TC) fallback."""
    try:
        cap = int(pltpu.get_tpu_info().vmem_capacity_bytes)
        if cap > 0:
            return cap
    except Exception:
        pass
    return 64 * _MIB


def _is_v5_chip():
    """v5-generation detection (small MXU): gate the packed matmul path off."""
    try:
        kind = jax.devices()[0].device_kind.lower()
    except Exception:
        return False
    return "v5" in kind


def _vmem_budget(cap):
    """Bytes available for the 4 streaming buffers (2x double-buffered in+out)."""
    return max(16 * _MIB, cap // 2 - 8 * _MIB)     # ~56 MiB on 128 MiB parts, ~24 MiB on v7x


def _pick_tile_rows(n_rows, row_bytes, sublane, budget):
    """tile_rows = min(vmem_bound, ceil(n_rows / MIN_STEPS)) rounded to sublane."""
    tr_vmem = max(sublane, (budget // (4 * row_bytes)) // sublane * sublane)
    tr_steps = max(sublane, _round_up(pl.cdiv(n_rows, _MIN_GRID_STEPS), sublane))
    tr = min(tr_vmem, tr_steps, _round_up(n_rows, sublane))
    return max(tr, sublane)


def _vmem_limit(tile_rows, row_elems, itemsize, cap):
    """Scoped-VMEM limit tracking the actual 4x tile footprint + headroom."""
    need = 4 * tile_rows * row_elems * itemsize + 2 * _MIB
    lim = max(need + 8 * _MIB, 32 * _MIB)
    return int(min(lim, cap - 16 * _MIB))


# ----------------------------------------------------------------------------
# pallas_call wrappers
# ----------------------------------------------------------------------------
def _plain_path(x2, w_f32, b_f32, eps, cap):
    n_rows, C = x2.shape
    itemsize = jnp.dtype(x2.dtype).itemsize
    sub = _sublanes(x2.dtype)
    tile_rows = _pick_tile_rows(n_rows, C * itemsize, sub, _vmem_budget(cap))
    grid = (pl.cdiv(n_rows, tile_rows),)

    return pl.pallas_call(
        functools.partial(_layernorm_kernel, eps=eps),
        out_shape=jax.ShapeDtypeStruct((n_rows, C), x2.dtype),
        grid_spec=pltpu.PrefetchScalarGridSpec(
            num_scalar_prefetch=0,
            grid=grid,
            in_specs=[
                pl.BlockSpec((tile_rows, C), lambda i: (i, 0)),
                pl.BlockSpec((1, C), lambda i: (0, 0)),
                pl.BlockSpec((1, C), lambda i: (0, 0)),
            ],
            out_specs=pl.BlockSpec((tile_rows, C), lambda i: (i, 0)),
        ),
        compiler_params=pltpu.CompilerParams(
            dimension_semantics=("parallel",),
            vmem_limit_bytes=_vmem_limit(tile_rows, C, itemsize, cap),
        ),
    )(x2, w_f32.reshape(1, C), b_f32.reshape(1, C))


def _packed_path(x2, w_f32, b_f32, eps, cap):
    n_rows, C = x2.shape
    g = 128 // C
    L = 128
    rp = n_rows // g                         # packed super-rows
    xp = x2.reshape(rp, L)                   # contiguous -> free bitcast reshape

    seg = jnp.arange(L, dtype=jnp.int32) // C
    P = (seg[:, None] == seg[None, :]).astype(jnp.float32) * (1.0 / C)
    w_t = jnp.tile(w_f32, g).reshape(1, L)
    b_t = jnp.tile(b_f32, g).reshape(1, L)

    itemsize = jnp.dtype(x2.dtype).itemsize
    sub = _sublanes(x2.dtype)
    tile_rows = _pick_tile_rows(rp, L * itemsize, sub, _vmem_budget(cap))
    grid = (pl.cdiv(rp, tile_rows),)

    out = pl.pallas_call(
        functools.partial(_layernorm_packed_kernel, eps=eps),
        out_shape=jax.ShapeDtypeStruct((rp, L), x2.dtype),
        grid_spec=pltpu.PrefetchScalarGridSpec(
            num_scalar_prefetch=0,
            grid=grid,
            in_specs=[
                pl.BlockSpec((tile_rows, L), lambda i: (i, 0)),
                pl.BlockSpec((L, L), lambda i: (0, 0)),
                pl.BlockSpec((1, L), lambda i: (0, 0)),
                pl.BlockSpec((1, L), lambda i: (0, 0)),
            ],
            out_specs=pl.BlockSpec((tile_rows, L), lambda i: (i, 0)),
        ),
        compiler_params=pltpu.CompilerParams(
            dimension_semantics=("parallel",),
            vmem_limit_bytes=_vmem_limit(tile_rows, L, itemsize, cap),
        ),
    )(xp, P, w_t, b_t)
    return out.reshape(n_rows, C)


def with_bias_layernorm(x, weight, bias, *, eps=1e-5):
    """Equivalent of WithBias_LayerNorm.forward: normalize over the last dim."""
    orig_shape = x.shape
    C = orig_shape[-1]
    assert weight.shape == (C,) and bias.shape == (C,)

    x2 = x.reshape(-1, C)
    n_rows = x2.shape[0]
    w_f32 = weight.astype(jnp.float32)
    b_f32 = bias.astype(jnp.float32)
    cap = _vmem_capacity_bytes()

    # Lane-dense packed path for tiny C (power-of-two divisor of 128, <= 64):
    # pure bitcast reshape in the wrapper, full 128-lane stores in the kernel.
    # Gated off on v5-generation chips where the HIGHEST f32 averaging matmul
    # would make the kernel MXU-bound instead of HBM-bound.
    # (64 < C < 128 still falls to the plain path and takes masked C-lane
    #  stores; extending packing to gcd(C,128) >= 32 is a possible follow-up.)
    use_packed = (C <= 64 and 128 % C == 0 and C < 128
                  and n_rows % (128 // C) == 0 and not _is_v5_chip())
    if use_packed:
        out2 = _packed_path(x2, w_f32, b_f32, eps, cap)
    else:
        out2 = _plain_path(x2, w_f32, b_f32, eps, cap)
    return out2.reshape(orig_shape)


# ----------------------------------------------------------------------------
# demo / self-check
# ----------------------------------------------------------------------------
def _reference(x, weight, bias, eps=1e-5):
    mu = jnp.mean(x, axis=-1, keepdims=True)
    var = jnp.mean((x - mu) ** 2, axis=-1, keepdims=True)
    return (x - mu) / jnp.sqrt(var + eps) * weight + bias


if __name__ == "__main__":
    key = jax.random.PRNGKey(0)
    k1, k2, k3 = jax.random.split(key, 3)

    # Case 1: channels-last feature map, C = 32 (packed lane-dense path on
    # v6e/v7x, plain path on v5e), params exactly as in __init__
    # (weight = ones, bias = zeros).
    B, H, W, C = 2, 16, 16, 32
    x = jax.random.normal(k1, (B, H, W, C), dtype=jnp.float32)
    weight = jnp.ones((C,), dtype=jnp.float32)
    bias = jnp.zeros((C,), dtype=jnp.float32)

    out = jax.block_until_ready(with_bias_layernorm(x, weight, bias))
    ref = _reference(x, weight, bias)
    assert jnp.allclose(out, ref, atol=1e-5, rtol=1e-5), "case-1 mismatch"

    # Case 2 (plain path; ragged row count exercises the masked partial tile):
    # C > 128 with non-trivial (simulated trained) weight / bias.
    B2, H2, W2, C2 = 2, 5, 7, 192
    x_b = jax.random.normal(k2, (B2, H2, W2, C2), dtype=jnp.float32)
    w_b = 1.0 + 0.1 * jax.random.normal(k3, (C2,), dtype=jnp.float32)
    b_b = 0.1 * jax.random.normal(k2, (C2,), dtype=jnp.float32)

    out_b = jax.block_until_ready(with_bias_layernorm(x_b, w_b, b_b))
    ref_b = _reference(x_b, w_b, b_b)
    assert jnp.allclose(out_b, ref_b, atol=1e-5, rtol=1e-5), "case-2 mismatch"

    print("KERNEL_OK")
</pallas_src>

<mosaic_0001>
module attributes {stable_mosaic.version = 11 : i64} {
  func.func @_layernorm_packed_kernel(%arg0: i32, %arg1: memref<16x128xf32, #tpu.memory_space<vmem>>, %arg2: memref<128x128xf32, #tpu.memory_space<vmem>>, %arg3: memref<1x128xf32, #tpu.memory_space<vmem>>, %arg4: memref<1x128xf32, #tpu.memory_space<vmem>>, %arg5: memref<16x128xf32, #tpu.memory_space<vmem>>) attributes {dimension_semantics = [#tpu.dimension_semantics<parallel>], iteration_bounds = array<i64: 8>, scalar_prefetch = 0 : i64, scratch_operands = 0 : i64, tpu.core_type = #tpu.core_type<tc>, window_params = [{transform_indices = @transform_0, window_bounds = array<i64: 16, 128>}, {pipeline_mode = #tpu.pipeline_mode<synchronous>, transform_indices = @transform_1, window_bounds = array<i64: 128, 128>}, {pipeline_mode = #tpu.pipeline_mode<synchronous>, transform_indices = @transform_2, window_bounds = array<i64: 1, 128>}, {pipeline_mode = #tpu.pipeline_mode<synchronous>, transform_indices = @transform_3, window_bounds = array<i64: 1, 128>}, {transform_indices = @transform_4, window_bounds = array<i64: 16, 128>}]} {
    %c0 = arith.constant 0 : index
    %c0_0 = arith.constant 0 : index
    %0 = vector.load %arg1[%c0, %c0_0] : memref<16x128xf32, #tpu.memory_space<vmem>>, vector<16x128xf32>
    %c0_1 = arith.constant 0 : index
    %c0_2 = arith.constant 0 : index
    %1 = vector.load %arg2[%c0_1, %c0_2] : memref<128x128xf32, #tpu.memory_space<vmem>>, vector<128x128xf32>
    %cst = arith.constant dense<0.000000e+00> : vector<16x128xf32>
    %2 = tpu.matmul %0, %1, %cst {dimension_numbers = #tpu.dot_dimension_numbers<[1], [0], [0], [1], [0, 0, 1, 1], [], []>, precision = #tpu.contract_precision<fp32>} : vector<16x128xf32>, vector<128x128xf32>, vector<16x128xf32> -> vector<16x128xf32>
    %3 = arith.subf %0, %2 : vector<16x128xf32>
    %4 = arith.mulf %3, %3 : vector<16x128xf32>
    %cst_3 = arith.constant dense<0.000000e+00> : vector<16x128xf32>
    %5 = tpu.matmul %4, %1, %cst_3 {dimension_numbers = #tpu.dot_dimension_numbers<[1], [0], [0], [1], [0, 0, 1, 1], [], []>, precision = #tpu.contract_precision<fp32>} : vector<16x128xf32>, vector<128x128xf32>, vector<16x128xf32> -> vector<16x128xf32>
    %cst_4 = arith.constant 9.99999974E-6 : f32
    %6 = vector.broadcast %cst_4 : f32 to vector<16x128xf32>
    %7 = arith.addf %5, %6 : vector<16x128xf32>
    %8 = math.rsqrt %7 : vector<16x128xf32>
    %9 = arith.mulf %3, %8 : vector<16x128xf32>
    %c0_5 = arith.constant 0 : index
    %c0_6 = arith.constant 0 : index
    %10 = vector.load %arg3[%c0_5, %c0_6] : memref<1x128xf32, #tpu.memory_space<vmem>>, vector<1x128xf32>
    %11 = vector.broadcast %10 : vector<1x128xf32> to vector<16x128xf32>
    %12 = arith.mulf %9, %11 : vector<16x128xf32>
    %c0_7 = arith.constant 0 : index
    %c0_8 = arith.constant 0 : index
    %13 = vector.load %arg4[%c0_7, %c0_8] : memref<1x128xf32, #tpu.memory_space<vmem>>, vector<1x128xf32>
    %14 = vector.broadcast %13 : vector<1x128xf32> to vector<16x128xf32>
    %15 = arith.addf %12, %14 : vector<16x128xf32>
    %c0_9 = arith.constant 0 : index
    %c0_10 = arith.constant 0 : index
    %16 = vector.load %arg5[%c0_9, %c0_10] : memref<16x128xf32, #tpu.memory_space<vmem>>, vector<16x128xf32>
    tpu.vector_store %arg5[%c0_9, %c0_10], %15 {strides = array<i32>} : memref<16x128xf32, #tpu.memory_space<vmem>>, vector<16x128xf32>,
    return
  }
  func.func @transform_0(%arg0: i32) -> (i32, i32) {
    %c0_i32 = arith.constant 0 : i32
    %c0_i32_0 = arith.constant 0 : i32
    return %arg0, %c0_i32 : i32, i32
  }
  func.func @transform_1(%arg0: i32) -> (i32, i32) {
    %c0_i32 = arith.constant 0 : i32
    %c0_i32_0 = arith.constant 0 : i32
    %c0_i32_1 = arith.constant 0 : i32
    return %c0_i32, %c0_i32_0 : i32, i32
  }
  func.func @transform_2(%arg0: i32) -> (i32, i32) {
    %c0_i32 = arith.constant 0 : i32
    %c0_i32_0 = arith.constant 0 : i32
    %c0_i32_1 = arith.constant 0 : i32
    return %c0_i32, %c0_i32_0 : i32, i32
  }
  func.func @transform_3(%arg0: i32) -> (i32, i32) {
    %c0_i32 = arith.constant 0 : i32
    %c0_i32_0 = arith.constant 0 : i32
    %c0_i32_1 = arith.constant 0 : i32
    return %c0_i32, %c0_i32_0 : i32, i32
  }
  func.func @transform_4(%arg0: i32) -> (i32, i32) {
    %c0_i32 = arith.constant 0 : i32
    %c0_i32_0 = arith.constant 0 : i32
    return %arg0, %c0_i32 : i32, i32
  }
}

</mosaic_0001>

<llo_original>
// kernel: tpu_custom_call.1
$region0: #{tpu_custom_call.1}
  #allocation0 [shape = 'u32[]', space=smem, size = 0x4, offset = 0x4, fixed_abs, tag = 'smem constant byte address 0x4 - core index']
  #allocation1 [shape = 'u32[144,128]{1,0:T(1,128)}', space=vmem, size = 0x12000, scoped, tag = 'internal scratch']
  %s0 = inlined_call_operand.hbm [shape: f32[128,128], index: 0, kind: input, shape index: {}]
  %s1 = inlined_call_operand.hbm [shape: f32[128,128], index: 1, kind: input, shape index: {}]
  %s2 = inlined_call_operand.vmem [shape: f32[1,128], index: 2, kind: input, shape index: {}]
  %s3 = inlined_call_operand.vmem [shape: f32[1,128], index: 3, kind: input, shape index: {}]
  %s4 = inlined_call_operand.hbm [shape: f32[128,128], index: 4, kind: output, shape index: {}]
  %s5 = sld [smem:[#allocation0]]
  $region57: #{tpu_custom_call.1} parent=0
    _
  %s7 = ssub.s32 1, %s5
  %s8 = scalar_select 0, %s7, %s5
  $region1: #{tpu_custom_call.1} parent=0
    #allocation2 [shape = 'u8[16384]{0}', space=vmem, size = 0x4000, scoped, tag = 'input window, operand 0']
    #allocation3 [shape = 's32[2]{0}', space=sflag, size = 0x8, scoped, tag = 'scoped memory for tpu_custom_call.1']
    #allocation4 [shape = 's32[2]{0}', space=sflag, size = 0x8, scoped, tag = 'scoped memory for tpu_custom_call.1']
    #allocation5 [shape = 'u8[65536]{0}', space=vmem, size = 0x10000, scoped, tag = 'input window, operand 1, single buffered']
    #allocation6 [shape = 's32[1]{0}', space=sflag, size = 0x4, scoped, tag = 'scoped memory for tpu_custom_call.1']
    #allocation7 [shape = 'u8[16384]{0}', space=vmem, size = 0x4000, scoped, tag = 'output window, operand 0']
    %9 = vsyncpa [#allocation3], 0
    %s10 = scalar_lea.sflag [#allocation3], 1
    %11 = vsyncpa %s10, 0
    %12 = vsyncpa [#allocation6], 0
    %13 = vsyncpa [#allocation4], 0
    %s14 = scalar_lea.sflag [#allocation4], 1
    %15 = vsyncpa %s14, 0
    loop: start=0, step=1, limit=10
    $region2: #{tpu_custom_call.1} parent=1 // loop_pre_header
      _
    $region3: #{tpu_custom_call.1} parent=1 // loop_header
      %s17 = sphi 0, %s21
      %p18 = scmp.ge.s32.totalorder %s17, 10
      %s27 = sphi 0, %s29
      %s30 = sphi 0, %s27
      %s31 = sphi 0, %s30
      %s47 = sphi 0, %s31
      %s51 = sphi 0, %s51
      %s53 = sphi 0, %s51
      %s54 = sphi 0, %s53
      %s68 = sphi 0, %s54
      %s72 = sphi 0, %s72
      %s74 = sphi 0, %s72
      %s75 = sphi 0, %s74
      %s89 = sphi 0, %s75
      %s93 = sphi 0, %s93
      %s95 = sphi 0, %s93
      %s96 = sphi 0, %s95
      %s110 = sphi 0, %s96
      %s116 = sphi 0, %s118
      %s119 = sphi 0, %s116
      %s120 = sphi 0, %s119
      %s136 = sphi 0, %s120
    $region4: #{tpu_custom_call.1} parent=1 // loop_header_branch
      %20 = sbr.rel (%p18) target = $region8
    $region5: #{tpu_custom_call.1} parent=1 // loop_body
      %s22 = ssub.s32 %s17, 1
      %s23 = ssub.s32 %s17, 2
      %s24 = sadd.s32 %s17, 1
      %s25 = ssub.s32 %s17, %s24
      %p26 = scmp.eq.s32.totalorder %s25, 0
      %s28 = sadd.s32 %s27, 1
      %s29 = scalar_select %p26, %s27, %s28
      %p32 = pneg %p26
      %p33 = scmp.eq.s32.totalorder %s17, 7
      %p34 = por %p32, %p33
      %p35 = scmp.ne.s32.totalorder %s27, %s30
      %p36 = scmp.eq.s32.totalorder %s17, 0
      %p37 = por %p35, %p36
      %p38 = scmp.ne.s32.totalorder %s27, %s30
      %p39 = scmp.eq.s32.totalorder %s22, 7
      %p40 = por %p38, %p39
      %p41 = scmp.ne.s32.totalorder %s30, %s31
      %p42 = scmp.eq.s32.totalorder %s22, 0
      %p43 = por %p41, %p42
      %p44 = scmp.ne.s32.totalorder %s30, %s31
      %p45 = scmp.eq.s32.totalorder %s23, 7
      %p46 = por %p44, %p45
      %p48 = scmp.ne.s32.totalorder %s31, %s47
      %p49 = scmp.eq.s32.totalorder %s23, 0
      %p50 = por %p48, %p49
      %s52 = sadd.s32 %s51, 1
      %p55 = scmp.eq.s32.totalorder %s17, 7
      %p56 = scmp.ne.s32.totalorder %s51, %s53
      %p57 = scmp.eq.s32.totalorder %s17, 0
      %p58 = por %p56, %p57
      %p59 = scmp.ne.s32.totalorder %s51, %s53
      %p60 = scmp.eq.s32.totalorder %s22, 7
      %p61 = por %p59, %p60
      %p62 = scmp.ne.s32.totalorder %s53, %s54
      %p63 = scmp.eq.s32.totalorder %s22, 0
      %p64 = por %p62, %p63
      %p65 = scmp.ne.s32.totalorder %s53, %s54
      %p66 = scmp.eq.s32.totalorder %s23, 7
      %p67 = por %p65, %p66
      %p69 = scmp.ne.s32.totalorder %s54, %s68
      %p70 = scmp.eq.s32.totalorder %s23, 0
      %p71 = por %p69, %p70
      %s73 = sadd.s32 %s72, 1
      %p76 = scmp.eq.s32.totalorder %s17, 7
      %p77 = scmp.ne.s32.totalorder %s72, %s74
      %p78 = scmp.eq.s32.totalorder %s17, 0
      %p79 = por %p77, %p78
      %p80 = scmp.ne.s32.totalorder %s72, %s74
      %p81 = scmp.eq.s32.totalorder %s22, 7
      %p82 = por %p80, %p81
      %p83 = scmp.ne.s32.totalorder %s74, %s75
      %p84 = scmp.eq.s32.totalorder %s22, 0
      %p85 = por %p83, %p84
      %p86 = scmp.ne.s32.totalorder %s74, %s75
      %p87 = scmp.eq.s32.totalorder %s23, 7
      %p88 = por %p86, %p87
      %p90 = scmp.ne.s32.totalorder %s75, %s89
      %p91 = scmp.eq.s32.totalorder %s23, 0
      %p92 = por %p90, %p91
      %s94 = sadd.s32 %s93, 1
      %p97 = scmp.eq.s32.totalorder %s17, 7
      %p98 = scmp.ne.s32.totalorder %s93, %s95
      %p99 = scmp.eq.s32.totalorder %s17, 0
      %p100 = por %p98, %p99
      %p101 = scmp.ne.s32.totalorder %s93, %s95
      %p102 = scmp.eq.s32.totalorder %s22, 7
      %p103 = por %p101, %p102
      %p104 = scmp.ne.s32.totalorder %s95, %s96
      %p105 = scmp.eq.s32.totalorder %s22, 0
      %p106 = por %p104, %p105
      %p107 = scmp.ne.s32.totalorder %s95, %s96
      %p108 = scmp.eq.s32.totalorder %s23, 7
      %p109 = por %p107, %p108
      %p111 = scmp.ne.s32.totalorder %s96, %s110
      %p112 = scmp.eq.s32.totalorder %s23, 0
      %p113 = por %p111, %p112
      %s114 = ssub.s32 %s17, %s24
      %p115 = scmp.eq.s32.totalorder %s114, 0
      %s117 = sadd.s32 %s116, 1
      %s118 = scalar_select %p115, %s116, %s117
      %p121 = pneg %p115
      %p122 = scmp.eq.s32.totalorder %s17, 7
      %p123 = por %p121, %p122
      %p124 = scmp.ne.s32.totalorder %s116, %s119
      %p125 = scmp.eq.s32.totalorder %s17, 0
      %p126 = por %p124, %p125
      %p127 = scmp.ne.s32.totalorder %s116, %s119
      %p128 = scmp.eq.s32.totalorder %s22, 7
      %p129 = por %p127, %p128
      %p130 = scmp.ne.s32.totalorder %s119, %s120
      %p131 = scmp.eq.s32.totalorder %s22, 0
      %p132 = por %p130, %p131
      %p133 = scmp.ne.s32.totalorder %s119, %s120
      %p134 = scmp.eq.s32.totalorder %s23, 7
      %p135 = por %p133, %p134
      %p137 = scmp.ne.s32.totalorder %s120, %s136
      %p138 = scmp.eq.s32.totalorder %s23, 0
      %p139 = por %p137, %p138
      %p140 = scmp.le.s32.totalorder 1, %s17
      %p141 = scmp.lt.s32.totalorder %s17, 9
      %p142 = pnand %p140, %p141
      %p143 = pneg %p142
      // Predicated region
      $region9: #{tpu_custom_call.1} parent=5 // pred_check
        _
      $region10: #{tpu_custom_call.1} parent=5 // pred_check_branch
        %145 = sbr.rel (%p142) target = $region12
      $region11: #{tpu_custom_call.1} parent=5 // pred_region
        %s146 = ssub.s32 %s17, 1
        // Predicated region
        $region13: #{tpu_custom_call.1} parent=11 // pred_check
          %p147 = pneg %p64
        $region14: #{tpu_custom_call.1} parent=11 // pred_check_branch
          %149 = sbr.rel (%p147) target = $region16
        $region15: #{tpu_custom_call.1} parent=11 // pred_region
          %s151 = ssub.s32 2048, 2048
          %152 = vsyncadd [#allocation6], %s151
          %s153 = sshll.u32 [#allocation5], 4
          %s154 = int_to_ptr.vmem [resolvable:$true] %s153
          %159 = dma.hbm_to_vmem [thread:$0]  %s1, 2048, %s154, [#allocation6], 128, 128, 8
        $region16: #{tpu_custom_call.1} parent=11 // pred_fallthru
          _
        // Predicated region
        $region17: #{tpu_custom_call.1} parent=11 // pred_check
          %p160 = pneg %p85
        $region18: #{tpu_custom_call.1} parent=11 // pred_check_branch
          %162 = sbr.rel (%p160) target = $region20
        $region19: #{tpu_custom_call.1} parent=11 // pred_region
          _
        $region20: #{tpu_custom_call.1} parent=11 // pred_fallthru
          _
        // Predicated region
        $region21: #{tpu_custom_call.1} parent=11 // pred_check
          %p163 = pneg %p106
        $region22: #{tpu_custom_call.1} parent=11 // pred_check_branch
          %165 = sbr.rel (%p163) target = $region24
        $region23: #{tpu_custom_call.1} parent=11 // pred_region
          _
        $region24: #{tpu_custom_call.1} parent=11 // pred_fallthru
          _
      $region12: #{tpu_custom_call.1} parent=5 // pred_fallthru
        _
      %p166 = scmp.lt.s32.totalorder %s17, 8
      // Predicated region
      $region25: #{tpu_custom_call.1} parent=5 // pred_check
        %p167 = pneg %p166
      $region26: #{tpu_custom_call.1} parent=5 // pred_check_branch
        %169 = sbr.rel (%p167) target = $region28
      $region27: #{tpu_custom_call.1} parent=5 // pred_region
        // Predicated region
        $region29: #{tpu_custom_call.1} parent=27 // pred_check
          %p170 = pneg %p37
        $region30: #{tpu_custom_call.1} parent=27 // pred_check_branch
          %172 = sbr.rel (%p170) target = $region32
        $region31: #{tpu_custom_call.1} parent=27 // pred_region
          %s173 = sand.u32 %s27, 1
          %s174 = scalar_lea.sflag [#allocation3], %s173
          %s175 = sand.u32 %s27, 1
          %s176 = smul.addr %s175, 16
          %s177 = scalar_lea.vmem [#allocation2], %s176
          %s178 = smul.u32 2, %s17
          %s180 = ssub.s32 256, 256
          %181 = vsyncadd %s174, %s180
          %s182 = smul.addr %s178, 128
          %s183 = scalar_lea.hbm %s0, %s182
          %s184 = sshll.u32 %s177, 4
          %s185 = int_to_ptr.vmem [resolvable:$true] %s184
          %190 = dma.hbm_to_vmem [thread:$0]  %s183, 256, %s185, %s174, 128, 128, 8
        $region32: #{tpu_custom_call.1} parent=27 // pred_fallthru
          _
      $region28: #{tpu_custom_call.1} parent=5 // pred_fallthru
        _
      %p191 = scmp.le.s32.totalorder 1, %s17
      %p192 = scmp.lt.s32.totalorder %s17, 9
      %p193 = pnand %p191, %p192
      %p194 = pneg %p193
      // Predicated region
      $region33: #{tpu_custom_call.1} parent=5 // pred_check
        _
      $region34: #{tpu_custom_call.1} parent=5 // pred_check_branch
        %196 = sbr.rel (%p193) target = $region36
      $region35: #{tpu_custom_call.1} parent=5 // pred_region
        %s197 = ssub.s32 %s17, 1
        %s198 = sand.u32 %s30, 1
        %s199 = scalar_lea.sflag [#allocation3], %s198
        %s200 = sand.u32 %s30, 1
        %s201 = smul.addr %s200, 16
        %s202 = scalar_lea.vmem [#allocation2], %s201
        // Predicated region
        $region37: #{tpu_custom_call.1} parent=35 // pred_check
          %p203 = pneg %p43
        $region38: #{tpu_custom_call.1} parent=35 // pred_check_branch
          %205 = sbr.rel (%p203) target = $region40
        $region39: #{tpu_custom_call.1} parent=35 // pred_region
          %206 = dma.done %s199, 256
        $region40: #{tpu_custom_call.1} parent=35 // pred_fallthru
          _
        // Predicated region
        $region41: #{tpu_custom_call.1} parent=35 // pred_check
          %p207 = pneg %p64
        $region42: #{tpu_custom_call.1} parent=35 // pred_check_branch
          %209 = sbr.rel (%p207) target = $region44
        $region43: #{tpu_custom_call.1} parent=35 // pred_region
          %210 = dma.done [#allocation6], 2048
        $region44: #{tpu_custom_call.1} parent=35 // pred_fallthru
          _
        %s211 = sand.u32 %s30, 1
        %s212 = scalar_lea.sflag [#allocation3], %s211
        %s213 = sand.u32 %s30, 1
        %s214 = smul.addr %s213, 16
        %s215 = scalar_lea.vmem [#allocation2], %s214
        %p216 = pneg %p43
        %p217 = pneg %p40
        %p218 = pneg %p64
        %p219 = pneg %p61
        %p220 = pneg %p85
        %p221 = pneg %p82
        %p222 = pneg %p106
        %p223 = pneg %p103
        %p224 = pneg %p132
        %p225 = pneg %p129
        %s226 = sand.u32 %s119, 1
        %s227 = scalar_lea.sflag [#allocation4], %s226
        %s228 = sand.u32 %s119, 1
        %s229 = smul.addr %s228, 16
        %s230 = scalar_lea.vmem [#allocation7], %s229
        %s231 = smul.u32 2, %s22
        %s232 = smul.u32 2, %s22
        %v233 = vld [vmem:[%s202] sm:$0xff]
        %v234 = vld [vmem:[%s202 + $0x8] sm:$0xff]
        %v235 = vld [vmem:[#allocation5] sm:$0xff]
        %v236 = vld [vmem:[#allocation5 + $0x8] sm:$0xff]
        %v237 = vld [vmem:[#allocation5 + $0x10] sm:$0xff]
        %v238 = vld [vmem:[#allocation5 + $0x18] sm:$0xff]
        %v239 = vld [vmem:[#allocation5 + $0x20] sm:$0xff]
        %v240 = vld [vmem:[#allocation5 + $0x28] sm:$0xff]
        %v241 = vld [vmem:[#allocation5 + $0x30] sm:$0xff]
        %v242 = vld [vmem:[#allocation5 + $0x38] sm:$0xff]
        %v243 = vld [vmem:[#allocation5 + $0x40] sm:$0xff]
        %v244 = vld [vmem:[#allocation5 + $0x48] sm:$0xff]
        %v245 = vld [vmem:[#allocation5 + $0x50] sm:$0xff]
        %v246 = vld [vmem:[#allocation5 + $0x58] sm:$0xff]
        %v247 = vld [vmem:[#allocation5 + $0x60] sm:$0xff]
        %v248 = vld [vmem:[#allocation5 + $0x68] sm:$0xff]
        %v249 = vld [vmem:[#allocation5 + $0x70] sm:$0xff]
        %v250 = vld [vmem:[#allocation5 + $0x78] sm:$0xff]
        %251 = vmatprep.subr.mxu0 0.0
        %v252 = vand.u32 %v235, 4294901760
        %253 = vmatpush1.msra.mxu0 %v252
        %254 = vmatprep.subr.mxu0 0.0
        %v255 = vand.u32 %v236, 4294901760
        %256 = vmatpush1.msra.mxu0 %v255
        %257 = vmatprep.subr.mxu0 0.0
        %v258 = vand.u32 %v237, 4294901760
        %259 = vmatpush1.msra.mxu0 %v258
        %260 = vmatprep.subr.mxu0 0.0
        %v261 = vand.u32 %v238, 4294901760
        %262 = vmatpush1.msra.mxu0 %v261
        %263 = vmatprep.subr.mxu0 0.0
        %v264 = vand.u32 %v239, 4294901760
        %265 = vmatpush1.msra.mxu0 %v264
        %266 = vmatprep.subr.mxu0 0.0
        %v267 = vand.u32 %v240, 4294901760
        %268 = vmatpush1.msra.mxu0 %v267
        %269 = vmatprep.subr.mxu0 0.0
        %v270 = vand.u32 %v241, 4294901760
        %271 = vmatpush1.msra.mxu0 %v270
        %272 = vmatprep.subr.mxu0 0.0
        %v273 = vand.u32 %v242, 4294901760
        %274 = vmatpush1.msra.mxu0 %v273
        %275 = vmatprep.subr.mxu0 0.0
        %v276 = vand.u32 %v243, 4294901760
        %277 = vmatpush1.msra.mxu0 %v276
        %278 = vmatprep.subr.mxu0 0.0
        %v279 = vand.u32 %v244, 4294901760
        %280 = vmatpush1.msra.mxu0 %v279
        %281 = vmatprep.subr.mxu0 0.0
        %v282 = vand.u32 %v245, 4294901760
        %283 = vmatpush1.msra.mxu0 %v282
        %284 = vmatprep.subr.mxu0 0.0
        %v285 = vand.u32 %v246, 4294901760
        %286 = vmatpush1.msra.mxu0 %v285
        %287 = vmatprep.subr.mxu0 0.0
        %v288 = vand.u32 %v247, 4294901760
        %289 = vmatpush1.msra.mxu0 %v288
        %290 = vmatprep.subr.mxu0 0.0
        %v291 = vand.u32 %v248, 4294901760
        %292 = vmatpush1.msra.mxu0 %v291
        %293 = vmatprep.subr.mxu0 0.0
        %v294 = vand.u32 %v249, 4294901760
        %295 = vmatpush1.msra.mxu0 %v294
        %296 = vmatprep.subr.mxu0 0.0
        %v297 = vand.u32 %v250, 4294901760
        %298 = vmatpush1.msra.mxu0 %v297
        %299 = vmatprep.subr.mxu0 0.0
        %300 = vmatpush1.msra.mxu0 0.0
        %301 = vmatprep.subr.mxu0 0.0
        %302 = vmatpush1.msra.mxu0 0.0
        %303 = vmatprep.subr.mxu0 0.0
        %304 = vmatpush1.msra.mxu0 0.0
        %305 = vmatprep.subr.mxu0 0.0
        %306 = vmatpush1.msra.mxu0 0.0
        %307 = vmatprep.subr.mxu0 0.0
        %308 = vmatpush1.msra.mxu0 0.0
        %309 = vmatprep.subr.mxu0 0.0
        %310 = vmatpush1.msra.mxu0 0.0
        %311 = vmatprep.subr.mxu0 0.0
        %312 = vmatpush1.msra.mxu0 0.0
        %313 = vmatprep.subr.mxu0 0.0
        %314 = vmatpush1.msra.mxu0 0.0
        %315 = vmatprep.subr.mxu0 0.0
        %316 = vmatpush1.msra.mxu0 0.0
        %317 = vmatprep.subr.mxu0 0.0
        %318 = vmatpush1.msra.mxu0 0.0
        %319 = vmatprep.subr.mxu0 0.0
        %320 = vmatpush1.msra.mxu0 0.0
        %321 = vmatprep.subr.mxu0 0.0
        %322 = vmatpush1.msra.mxu0 0.0
        %323 = vmatprep.subr.mxu0 0.0
        %324 = vmatpush1.msra.mxu0 0.0
        %325 = vmatprep.subr.mxu0 0.0
        %326 = vmatpush1.msra.mxu0 0.0
        %327 = vmatprep.subr.mxu0 0.0
        %328 = vmatpush1.msra.mxu0 0.0
        %329 = vmatprep.subr.mxu0 0.0
        %330 = vmatpush1.msra.mxu0 0.0
        %331 = vmatprep.mubr.f32.mxu0 0.0
        %v332 = vand.u32 %v233, 4294901760
        %v333 = vsub.f32 %v233, %v332
        %v334 = vand.u32 %v333, 4294901760
        %v335 = vsub.f32 %v333, %v334
        %v336 = vand.u32 %v335, 4294901760
        %337 = vmatmul.mubr.f32.gmra.mrb[0].mxu0 %v336
        %v338 = vpop.f32.mrb[0].mxu0
        %v339 = vadd.f32 0.0, %v338
        %v340 = vpop.f32.mrb[0].mxu0
        %341 = vmatprep.mubr.f32.mxu0 0.0
        %v342 = vand.u32 %v234, 4294901760
        %v343 = vsub.f32 %v234, %v342
        %v344 = vand.u32 %v343, 4294901760
        %v345 = vsub.f32 %v343, %v344
        %v346 = vand.u32 %v345, 4294901760
        %347 = vmatmul.mubr.f32.gmra.mrb[0].mxu0 %v346
        %v348 = vpop.f32.mrb[0].mxu0
        %v349 = vadd.f32 0.0, %v348
        %v350 = vpop.f32.mrb[0].mxu0
        %351 = vdwg.mxu0
        %352 = vmatprep.subr.mxu0 0.0
        %v353 = vand.u32 %v235, 4294901760
        %v354 = vsub.f32 %v235, %v353
        %v355 = vand.u32 %v354, 4294901760
        %v356 = vsub.f32 %v354, %v355
        %v357 = vand.u32 %v356, 4294901760
        %358 = vmatpush1.msra.mxu0 %v357
        %359 = vmatprep.subr.mxu0 0.0
        %v360 = vand.u32 %v236, 4294901760
        %v361 = vsub.f32 %v236, %v360
        %v362 = vand.u32 %v361, 4294901760
        %v363 = vsub.f32 %v361, %v362
        %v364 = vand.u32 %v363, 4294901760
        %365 = vmatpush1.msra.mxu0 %v364
        %366 = vmatprep.subr.mxu0 0.0
        %v367 = vand.u32 %v237, 4294901760
        %v368 = vsub.f32 %v237, %v367
        %v369 = vand.u32 %v368, 4294901760
        %v370 = vsub.f32 %v368, %v369
        %v371 = vand.u32 %v370, 4294901760
        %372 = vmatpush1.msra.mxu0 %v371
        %373 = vmatprep.subr.mxu0 0.0
        %v374 = vand.u32 %v238, 4294901760
        %v375 = vsub.f32 %v238, %v374
        %v376 = vand.u32 %v375, 4294901760
        %v377 = vsub.f32 %v375, %v376
        %v378 = vand.u32 %v377, 4294901760
        %379 = vmatpush1.msra.mxu0 %v378
        %380 = vmatprep.subr.mxu0 0.0
        %v381 = vand.u32 %v239, 4294901760
        %v382 = vsub.f32 %v239, %v381
        %v383 = vand.u32 %v382, 4294901760
        %v384 = vsub.f32 %v382, %v383
        %v385 = vand.u32 %v384, 4294901760
        %386 = vmatpush1.msra.mxu0 %v385
        %387 = vmatprep.subr.mxu0 0.0
        %v388 = vand.u32 %v240, 4294901760
        %v389 = vsub.f32 %v240, %v388
        %v390 = vand.u32 %v389, 4294901760
        %v391 = vsub.f32 %v389, %v390
        %v392 = vand.u32 %v391, 4294901760
        %393 = vmatpush1.msra.mxu0 %v392
        %394 = vmatprep.subr.mxu0 0.0
        %v395 = vand.u32 %v241, 4294901760
        %v396 = vsub.f32 %v241, %v395
        %v397 = vand.u32 %v396, 4294901760
        %v398 = vsub.f32 %v396, %v397
        %v399 = vand.u32 %v398, 4294901760
        %400 = vmatpush1.msra.mxu0 %v399
        %401 = vmatprep.subr.mxu0 0.0
        %v402 = vand.u32 %v242, 4294901760
        %v403 = vsub.f32 %v242, %v402
        %v404 = vand.u32 %v403, 4294901760
        %v405 = vsub.f32 %v403, %v404
        %v406 = vand.u32 %v405, 4294901760
        %407 = vmatpush1.msra.mxu0 %v406
        %408 = vmatprep.subr.mxu0 0.0
        %v409 = vand.u32 %v243, 4294901760
        %v410 = vsub.f32 %v243, %v409
        %v411 = vand.u32 %v410, 4294901760
        %v412 = vsub.f32 %v410, %v411
        %v413 = vand.u32 %v412, 4294901760
        %414 = vmatpush1.msra.mxu0 %v413
        %415 = vmatprep.subr.mxu0 0.0
        %v416 = vand.u32 %v244, 4294901760
        %v417 = vsub.f32 %v244, %v416
        %v418 = vand.u32 %v417, 4294901760
        %v419 = vsub.f32 %v417, %v418
        %v420 = vand.u32 %v419, 4294901760
        %421 = vmatpush1.msra.mxu0 %v420
        %422 = vmatprep.subr.mxu0 0.0
        %v423 = vand.u32 %v245, 4294901760
        %v424 = vsub.f32 %v245, %v423
        %v425 = vand.u32 %v424, 4294901760
        %v426 = vsub.f32 %v424, %v425
        %v427 = vand.u32 %v426, 4294901760
        %428 = vmatpush1.msra.mxu0 %v427
        %429 = vmatprep.subr.mxu0 0.0
        %v430 = vand.u32 %v246, 4294901760
        %v431 = vsub.f32 %v246, %v430
        %v432 = vand.u32 %v431, 4294901760
        %v433 = vsub.f32 %v431, %v432
        %v434 = vand.u32 %v433, 4294901760
        %435 = vmatpush1.msra.mxu0 %v434
        %436 = vmatprep.subr.mxu0 0.0
        %v437 = vand.u32 %v247, 4294901760
        %v438 = vsub.f32 %v247, %v437
        %v439 = vand.u32 %v438, 4294901760
        %v440 = vsub.f32 %v438, %v439
        %v441 = vand.u32 %v440, 4294901760
        %442 = vmatpush1.msra.mxu0 %v441
        %443 = vmatprep.subr.mxu0 0.0
        %v444 = vand.u32 %v248, 4294901760
        %v445 = vsub.f32 %v248, %v444
        %v446 = vand.u32 %v445, 4294901760
        %v447 = vsub.f32 %v445, %v446
        %v448 = vand.u32 %v447, 4294901760
        %449 = vmatpush1.msra.mxu0 %v448
        %450 = vmatprep.subr.mxu0 0.0
        %v451 = vand.u32 %v249, 4294901760
        %v452 = vsub.f32 %v249, %v451
        %v453 = vand.u32 %v452, 4294901760
        %v454 = vsub.f32 %v452, %v453
        %v455 = vand.u32 %v454, 4294901760
        %456 = vmatpush1.msra.mxu0 %v455
        %457 = vmatprep.subr.mxu0 0.0
        %v458 = vand.u32 %v250, 4294901760
        %v459 = vsub.f32 %v250, %v458
        %v460 = vand.u32 %v459, 4294901760
        %v461 = vsub.f32 %v459, %v460
        %v462 = vand.u32 %v461, 4294901760
        %463 = vmatpush1.msra.mxu0 %v462
        %464 = vmatprep.subr.mxu0 0.0
        %465 = vmatpush1.msra.mxu0 0.0
        %466 = vmatprep.subr.mxu0 0.0
        %467 = vmatpush1.msra.mxu0 0.0
        %468 = vmatprep.subr.mxu0 0.0
        %469 = vmatpush1.msra.mxu0 0.0
        %470 = vmatprep.subr.mxu0 0.0
        %471 = vmatpush1.msra.mxu0 0.0
        %472 = vmatprep.subr.mxu0 0.0
        %473 = vmatpush1.msra.mxu0 0.0
        %474 = vmatprep.subr.mxu0 0.0
        %475 = vmatpush1.msra.mxu0 0.0
        %476 = vmatprep.subr.mxu0 0.0
        %477 = vmatpush1.msra.mxu0 0.0
        %478 = vmatprep.subr.mxu0 0.0
        %479 = vmatpush1.msra.mxu0 0.0
        %480 = vmatprep.subr.mxu0 0.0
        %481 = vmatpush1.msra.mxu0 0.0
        %482 = vmatprep.subr.mxu0 0.0
        %483 = vmatpush1.msra.mxu0 0.0
        %484 = vmatprep.subr.mxu0 0.0
        %485 = vmatpush1.msra.mxu0 0.0
        %486 = vmatprep.subr.mxu0 0.0
        %487 = vmatpush1.msra.mxu0 0.0
        %488 = vmatprep.subr.mxu0 0.0
        %489 = vmatpush1.msra.mxu0 0.0
        %490 = vmatprep.subr.mxu0 0.0
        %491 = vmatpush1.msra.mxu0 0.0
        %492 = vmatprep.subr.mxu0 0.0
        %493 = vmatpush1.msra.mxu0 0.0
        %494 = vmatprep.subr.mxu0 0.0
        %495 = vmatpush1.msra.mxu0 0.0
        %496 = vmatprep.mubr.f32.mxu0 0.0
        %v497 = vand.u32 %v233, 4294901760
        %498 = vmatmul.mubr.f32.gmra.mrb[0].mxu0 %v497
        %v499 = vpop.f32.mrb[0].mxu0
        %v500 = vadd.f32 %v339, %v499
        %v501 = vpop.f32.mrb[0].mxu0
        %502 = vmatprep.mubr.f32.mxu0 0.0
        %v503 = vand.u32 %v234, 4294901760
        %504 = vmatmul.mubr.f32.gmra.mrb[0].mxu0 %v503
        %v505 = vpop.f32.mrb[0].mxu0
        %v506 = vadd.f32 %v349, %v505
        %v507 = vpop.f32.mrb[0].mxu0
        %508 = vdwg.mxu0
        %509 = vmatprep.subr.mxu0 0.0
        %v510 = vand.u32 %v235, 4294901760
        %v511 = vsub.f32 %v235, %v510
        %512 = vmatpush1.msra.mxu0 %v511
        %513 = vmatprep.subr.mxu0 0.0
        %v514 = vand.u32 %v236, 4294901760
        %v515 = vsub.f32 %v236, %v514
        %516 = vmatpush1.msra.mxu0 %v515
        %517 = vmatprep.subr.mxu0 0.0
        %v518 = vand.u32 %v237, 4294901760
        %v519 = vsub.f32 %v237, %v518
        %520 = vmatpush1.msra.mxu0 %v519
        %521 = vmatprep.subr.mxu0 0.0
        %v522 = vand.u32 %v238, 4294901760
        %v523 = vsub.f32 %v238, %v522
        %524 = vmatpush1.msra.mxu0 %v523
        %525 = vmatprep.subr.mxu0 0.0
        %v526 = vand.u32 %v239, 4294901760
        %v527 = vsub.f32 %v239, %v526
        %528 = vmatpush1.msra.mxu0 %v527
        %529 = vmatprep.subr.mxu0 0.0
        %v530 = vand.u32 %v240, 4294901760
        %v531 = vsub.f32 %v240, %v530
        %532 = vmatpush1.msra.mxu0 %v531
        %533 = vmatprep.subr.mxu0 0.0
        %v534 = vand.u32 %v241, 4294901760
        %v535 = vsub.f32 %v241, %v534
        %536 = vmatpush1.msra.mxu0 %v535
        %537 = vmatprep.subr.mxu0 0.0
        %v538 = vand.u32 %v242, 4294901760
        %v539 = vsub.f32 %v242, %v538
        %540 = vmatpush1.msra.mxu0 %v539
        %541 = vmatprep.subr.mxu0 0.0
        %v542 = vand.u32 %v243, 4294901760
        %v543 = vsub.f32 %v243, %v542
        %544 = vmatpush1.msra.mxu0 %v543
        %545 = vmatprep.subr.mxu0 0.0
        %v546 = vand.u32 %v244, 4294901760
        %v547 = vsub.f32 %v244, %v546
        %548 = vmatpush1.msra.mxu0 %v547
        %549 = vmatprep.subr.mxu0 0.0
        %v550 = vand.u32 %v245, 4294901760
        %v551 = vsub.f32 %v245, %v550
        %552 = vmatpush1.msra.mxu0 %v551
        %553 = vmatprep.subr.mxu0 0.0
        %v554 = vand.u32 %v246, 4294901760
        %v555 = vsub.f32 %v246, %v554
        %556 = vmatpush1.msra.mxu0 %v555
        %557 = vmatprep.subr.mxu0 0.0
        %v558 = vand.u32 %v247, 4294901760
        %v559 = vsub.f32 %v247, %v558
        %560 = vmatpush1.msra.mxu0 %v559
        %561 = vmatprep.subr.mxu0 0.0
        %v562 = vand.u32 %v248, 4294901760
        %v563 = vsub.f32 %v248, %v562
        %564 = vmatpush1.msra.mxu0 %v563
        %565 = vmatprep.subr.mxu0 0.0
        %v566 = vand.u32 %v249, 4294901760
        %v567 = vsub.f32 %v249, %v566
        %568 = vmatpush1.msra.mxu0 %v567
        %569 = vmatprep.subr.mxu0 0.0
        %v570 = vand.u32 %v250, 4294901760
        %v571 = vsub.f32 %v250, %v570
        %572 = vmatpush1.msra.mxu0 %v571
        %573 = vmatprep.subr.mxu0 0.0
        %574 = vmatpush1.msra.mxu0 0.0
        %575 = vmatprep.subr.mxu0 0.0
        %576 = vmatpush1.msra.mxu0 0.0
        %577 = vmatprep.subr.mxu0 0.0
        %578 = vmatpush1.msra.mxu0 0.0
        %579 = vmatprep.subr.mxu0 0.0
        %580 = vmatpush1.msra.mxu0 0.0
        %581 = vmatprep.subr.mxu0 0.0
        %582 = vmatpush1.msra.mxu0 0.0
        %583 = vmatprep.subr.mxu0 0.0
        %584 = vmatpush1.msra.mxu0 0.0
        %585 = vmatprep.subr.mxu0 0.0
        %586 = vmatpush1.msra.mxu0 0.0
        %587 = vmatprep.subr.mxu0 0.0
        %588 = vmatpush1.msra.mxu0 0.0
        %589 = vmatprep.subr.mxu0 0.0
        %590 = vmatpush1.msra.mxu0 0.0
        %591 = vmatprep.subr.mxu0 0.0
        %592 = vmatpush1.msra.mxu0 0.0
        %593 = vmatprep.subr.mxu0 0.0
        %594 = vmatpush1.msra.mxu0 0.0
        %595 = vmatprep.subr.mxu0 0.0
        %596 = vmatpush1.msra.mxu0 0.0
        %597 = vmatprep.subr.mxu0 0.0
        %598 = vmatpush1.msra.mxu0 0.0
        %599 = vmatprep.subr.mxu0 0.0
        %600 = vmatpush1.msra.mxu0 0.0
        %601 = vmatprep.subr.mxu0 0.0
        %602 = vmatpush1.msra.mxu0 0.0
        %603 = vmatprep.subr.mxu0 0.0
        %604 = vmatpush1.msra.mxu0 0.0
        %605 = vmatprep.mubr.f32.mxu0 0.0
        %v606 = vand.u32 %v233, 4294901760
        %v607 = vsub.f32 %v233, %v606
        %608 = vmatmul.mubr.f32.gmra.mrb[0].mxu0 %v607
        %v609 = vpop.f32.mrb[0].mxu0
        %v610 = vadd.f32 %v500, %v609
        %v611 = vpop.f32.mrb[0].mxu0
        %612 = vmatprep.mubr.f32.mxu0 0.0
        %v613 = vand.u32 %v234, 4294901760
        %v614 = vsub.f32 %v234, %v613
        %615 = vmatmul.mubr.f32.gmra.mrb[0].mxu0 %v614
        %v616 = vpop.f32.mrb[0].mxu0
        %v617 = vadd.f32 %v506, %v616
        %v618 = vpop.f32.mrb[0].mxu0
        %619 = vdwg.mxu0
        %620 = vmatprep.subr.mxu0 0.0
        %v621 = vand.u32 %v235, 4294901760
        %622 = vmatpush1.msra.mxu0 %v621
        %623 = vmatprep.subr.mxu0 0.0
        %v624 = vand.u32 %v236, 4294901760
        %625 = vmatpush1.msra.mxu0 %v624
        %626 = vmatprep.subr.mxu0 0.0
        %v627 = vand.u32 %v237, 4294901760
        %628 = vmatpush1.msra.mxu0 %v627
        %629 = vmatprep.subr.mxu0 0.0
        %v630 = vand.u32 %v238, 4294901760
        %631 = vmatpush1.msra.mxu0 %v630
        %632 = vmatprep.subr.mxu0 0.0
        %v633 = vand.u32 %v239, 4294901760
        %634 = vmatpush1.msra.mxu0 %v633
        %635 = vmatprep.subr.mxu0 0.0
        %v636 = vand.u32 %v240, 4294901760
        %637 = vmatpush1.msra.mxu0 %v636
        %638 = vmatprep.subr.mxu0 0.0
        %v639 = vand.u32 %v241, 4294901760
        %640 = vmatpush1.msra.mxu0 %v639
        %641 = vmatprep.subr.mxu0 0.0
        %v642 = vand.u32 %v242, 4294901760
        %643 = vmatpush1.msra.mxu0 %v642
        %644 = vmatprep.subr.mxu0 0.0
        %v645 = vand.u32 %v243, 4294901760
        %646 = vmatpush1.msra.mxu0 %v645
        %647 = vmatprep.subr.mxu0 0.0
        %v648 = vand.u32 %v244, 4294901760
        %649 = vmatpush1.msra.mxu0 %v648
        %650 = vmatprep.subr.mxu0 0.0
        %v651 = vand.u32 %v245, 4294901760
        %652 = vmatpush1.msra.mxu0 %v651
        %653 = vmatprep.subr.mxu0 0.0
        %v654 = vand.u32 %v246, 4294901760
        %655 = vmatpush1.msra.mxu0 %v654
        %656 = vmatprep.subr.mxu0 0.0
        %v657 = vand.u32 %v247, 4294901760
        %658 = vmatpush1.msra.mxu0 %v657
        %659 = vmatprep.subr.mxu0 0.0
        %v660 = vand.u32 %v248, 4294901760
        %661 = vmatpush1.msra.mxu0 %v660
        %662 = vmatprep.subr.mxu0 0.0
        %v663 = vand.u32 %v249, 4294901760
        %664 = vmatpush1.msra.mxu0 %v663
        %665 = vmatprep.subr.mxu0 0.0
        %v666 = vand.u32 %v250, 4294901760
        %667 = vmatpush1.msra.mxu0 %v666
        %668 = vmatprep.subr.mxu0 0.0
        %669 = vmatpush1.msra.mxu0 0.0
        %670 = vmatprep.subr.mxu0 0.0
        %671 = vmatpush1.msra.mxu0 0.0
        %672 = vmatprep.subr.mxu0 0.0
        %673 = vmatpush1.msra.mxu0 0.0
        %674 = vmatprep.subr.mxu0 0.0
        %675 = vmatpush1.msra.mxu0 0.0
        %676 = vmatprep.subr.mxu0 0.0
        %677 = vmatpush1.msra.mxu0 0.0
        %678 = vmatprep.subr.mxu0 0.0
        %679 = vmatpush1.msra.mxu0 0.0
        %680 = vmatprep.subr.mxu0 0.0
        %681 = vmatpush1.msra.mxu0 0.0
        %682 = vmatprep.subr.mxu0 0.0
        %683 = vmatpush1.msra.mxu0 0.0
        %684 = vmatprep.subr.mxu0 0.0
        %685 = vmatpush1.msra.mxu0 0.0
        %686 = vmatprep.subr.mxu0 0.0
        %687 = vmatpush1.msra.mxu0 0.0
        %688 = vmatprep.subr.mxu0 0.0
        %689 = vmatpush1.msra.mxu0 0.0
        %690 = vmatprep.subr.mxu0 0.0
        %691 = vmatpush1.msra.mxu0 0.0
        %692 = vmatprep.subr.mxu0 0.0
        %693 = vmatpush1.msra.mxu0 0.0
        %694 = vmatprep.subr.mxu0 0.0
        %695 = vmatpush1.msra.mxu0 0.0
        %696 = vmatprep.subr.mxu0 0.0
        %697 = vmatpush1.msra.mxu0 0.0
        %698 = vmatprep.subr.mxu0 0.0
        %699 = vmatpush1.msra.mxu0 0.0
        %700 = vmatprep.mubr.f32.mxu0 0.0
        %v701 = vand.u32 %v233, 4294901760
        %v702 = vsub.f32 %v233, %v701
        %v703 = vand.u32 %v702, 4294901760
        %704 = vmatmul.mubr.f32.gmra.mrb[0].mxu0 %v703
        %v705 = vpop.f32.mrb[0].mxu0
        %v706 = vadd.f32 %v610, %v705
        %v707 = vpop.f32.mrb[0].mxu0
        %708 = vmatprep.mubr.f32.mxu0 0.0
        %v709 = vand.u32 %v234, 4294901760
        %v710 = vsub.f32 %v234, %v709
        %v711 = vand.u32 %v710, 4294901760
        %712 = vmatmul.mubr.f32.gmra.mrb[0].mxu0 %v711
        %v713 = vpop.f32.mrb[0].mxu0
        %v714 = vadd.f32 %v617, %v713
        %v715 = vpop.f32.mrb[0].mxu0
        %716 = vdwg.mxu0
        %717 = vmatprep.subr.mxu0 0.0
        %v718 = vand.u32 %v235, 4294901760
        %v719 = vsub.f32 %v235, %v718
        %v720 = vand.u32 %v719, 4294901760
        %721 = vmatpush1.msra.mxu0 %v720
        %722 = vmatprep.subr.mxu0 0.0
        %v723 = vand.u32 %v236, 4294901760
        %v724 = vsub.f32 %v236, %v723
        %v725 = vand.u32 %v724, 4294901760
        %726 = vmatpush1.msra.mxu0 %v725
        %727 = vmatprep.subr.mxu0 0.0
        %v728 = vand.u32 %v237, 4294901760
        %v729 = vsub.f32 %v237, %v728
        %v730 = vand.u32 %v729, 4294901760
        %731 = vmatpush1.msra.mxu0 %v730
        %732 = vmatprep.subr.mxu0 0.0
        %v733 = vand.u32 %v238, 4294901760
        %v734 = vsub.f32 %v238, %v733
        %v735 = vand.u32 %v734, 4294901760
        %736 = vmatpush1.msra.mxu0 %v735
        %737 = vmatprep.subr.mxu0 0.0
        %v738 = vand.u32 %v239, 4294901760
        %v739 = vsub.f32 %v239, %v738
        %v740 = vand.u32 %v739, 4294901760
        %741 = vmatpush1.msra.mxu0 %v740
        %742 = vmatprep.subr.mxu0 0.0
        %v743 = vand.u32 %v240, 4294901760
        %v744 = vsub.f32 %v240, %v743
        %v745 = vand.u32 %v744, 4294901760
        %746 = vmatpush1.msra.mxu0 %v745
        %747 = vmatprep.subr.mxu0 0.0
        %v748 = vand.u32 %v241, 4294901760
        %v749 = vsub.f32 %v241, %v748
        %v750 = vand.u32 %v749, 4294901760
        %751 = vmatpush1.msra.mxu0 %v750
        %752 = vmatprep.subr.mxu0 0.0
        %v753 = vand.u32 %v242, 4294901760
        %v754 = vsub.f32 %v242, %v753
        %v755 = vand.u32 %v754, 4294901760
        %756 = vmatpush1.msra.mxu0 %v755
        %757 = vmatprep.subr.mxu0 0.0
        %v758 = vand.u32 %v243, 4294901760
        %v759 = vsub.f32 %v243, %v758
        %v760 = vand.u32 %v759, 4294901760
        %761 = vmatpush1.msra.mxu0 %v760
        %762 = vmatprep.subr.mxu0 0.0
        %v763 = vand.u32 %v244, 4294901760
        %v764 = vsub.f32 %v244, %v763
        %v765 = vand.u32 %v764, 4294901760
        %766 = vmatpush1.msra.mxu0 %v765
        %767 = vmatprep.subr.mxu0 0.0
        %v768 = vand.u32 %v245, 4294901760
        %v769 = vsub.f32 %v245, %v768
        %v770 = vand.u32 %v769, 4294901760
        %771 = vmatpush1.msra.mxu0 %v770
        %772 = vmatprep.subr.mxu0 0.0
        %v773 = vand.u32 %v246, 4294901760
        %v774 = vsub.f32 %v246, %v773
        %v775 = vand.u32 %v774, 4294901760
        %776 = vmatpush1.msra.mxu0 %v775
        %777 = vmatprep.subr.mxu0 0.0
        %v778 = vand.u32 %v247, 4294901760
        %v779 = vsub.f32 %v247, %v778
        %v780 = vand.u32 %v779, 4294901760
        %781 = vmatpush1.msra.mxu0 %v780
        %782 = vmatprep.subr.mxu0 0.0
        %v783 = vand.u32 %v248, 4294901760
        %v784 = vsub.f32 %v248, %v783
        %v785 = vand.u32 %v784, 4294901760
        %786 = vmatpush1.msra.mxu0 %v785
        %787 = vmatprep.subr.mxu0 0.0
        %v788 = vand.u32 %v249, 4294901760
        %v789 = vsub.f32 %v249, %v788
        %v790 = vand.u32 %v789, 4294901760
        %791 = vmatpush1.msra.mxu0 %v790
        %792 = vmatprep.subr.mxu0 0.0
        %v793 = vand.u32 %v250, 4294901760
        %v794 = vsub.f32 %v250, %v793
        %v795 = vand.u32 %v794, 4294901760
        %796 = vmatpush1.msra.mxu0 %v795
        %797 = vmatprep.subr.mxu0 0.0
        %798 = vmatpush1.msra.mxu0 0.0
        %799 = vmatprep.subr.mxu0 0.0
        %800 = vmatpush1.msra.mxu0 0.0
        %801 = vmatprep.subr.mxu0 0.0
        %802 = vmatpush1.msra.mxu0 0.0
        %803 = vmatprep.subr.mxu0 0.0
        %804 = vmatpush1.msra.mxu0 0.0
        %805 = vmatprep.subr.mxu0 0.0
        %806 = vmatpush1.msra.mxu0 0.0
        %807 = vmatprep.subr.mxu0 0.0
        %808 = vmatpush1.msra.mxu0 0.0
        %809 = vmatprep.subr.mxu0 0.0
        %810 = vmatpush1.msra.mxu0 0.0
        %811 = vmatprep.subr.mxu0 0.0
        %812 = vmatpush1.msra.mxu0 0.0
        %813 = vmatprep.subr.mxu0 0.0
        %814 = vmatpush1.msra.mxu0 0.0
        %815 = vmatprep.subr.mxu0 0.0
        %816 = vmatpush1.msra.mxu0 0.0
        %817 = vmatprep.subr.mxu0 0.0
        %818 = vmatpush1.msra.mxu0 0.0
        %819 = vmatprep.subr.mxu0 0.0
        %820 = vmatpush1.msra.mxu0 0.0
        %821 = vmatprep.subr.mxu0 0.0
        %822 = vmatpush1.msra.mxu0 0.0
        %823 = vmatprep.subr.mxu0 0.0
        %824 = vmatpush1.msra.mxu0 0.0
        %825 = vmatprep.subr.mxu0 0.0
        %826 = vmatpush1.msra.mxu0 0.0
        %827 = vmatprep.subr.mxu0 0.0
        %828 = vmatpush1.msra.mxu0 0.0
        %829 = vmatprep.mubr.f32.mxu0 0.0
        %v830 = vand.u32 %v233, 4294901760
        %831 = vmatmul.mubr.f32.gmra.mrb[0].mxu0 %v830
        %v832 = vpop.f32.mrb[0].mxu0
        %v833 = vadd.f32 %v706, %v832
        %v834 = vpop.f32.mrb[0].mxu0
        %835 = vmatprep.mubr.f32.mxu0 0.0
        %v836 = vand.u32 %v234, 4294901760
        %837 = vmatmul.mubr.f32.gmra.mrb[0].mxu0 %v836
        %v838 = vpop.f32.mrb[0].mxu0
        %v839 = vadd.f32 %v714, %v838
        %v840 = vpop.f32.mrb[0].mxu0
        %841 = vdwg.mxu0
        %842 = vmatprep.subr.mxu0 0.0
        %v843 = vand.u32 %v235, 4294901760
        %844 = vmatpush1.msra.mxu0 %v843
        %845 = vmatprep.subr.mxu0 0.0
        %v846 = vand.u32 %v236, 4294901760
        %847 = vmatpush1.msra.mxu0 %v846
        %848 = vmatprep.subr.mxu0 0.0
        %v849 = vand.u32 %v237, 4294901760
        %850 = vmatpush1.msra.mxu0 %v849
        %851 = vmatprep.subr.mxu0 0.0
        %v852 = vand.u32 %v238, 4294901760
        %853 = vmatpush1.msra.mxu0 %v852
        %854 = vmatprep.subr.mxu0 0.0
        %v855 = vand.u32 %v239, 4294901760
        %856 = vmatpush1.msra.mxu0 %v855
        %857 = vmatprep.subr.mxu0 0.0
        %v858 = vand.u32 %v240, 4294901760
        %859 = vmatpush1.msra.mxu0 %v858
        %860 = vmatprep.subr.mxu0 0.0
        %v861 = vand.u32 %v241, 4294901760
        %862 = vmatpush1.msra.mxu0 %v861
        %863 = vmatprep.subr.mxu0 0.0
        %v864 = vand.u32 %v242, 4294901760
        %865 = vmatpush1.msra.mxu0 %v864
        %866 = vmatprep.subr.mxu0 0.0
        %v867 = vand.u32 %v243, 4294901760
        %868 = vmatpush1.msra.mxu0 %v867
        %869 = vmatprep.subr.mxu0 0.0
        %v870 = vand.u32 %v244, 4294901760
        %871 = vmatpush1.msra.mxu0 %v870
        %872 = vmatprep.subr.mxu0 0.0
        %v873 = vand.u32 %v245, 4294901760
        %874 = vmatpush1.msra.mxu0 %v873
        %875 = vmatprep.subr.mxu0 0.0
        %v876 = vand.u32 %v246, 4294901760
        %877 = vmatpush1.msra.mxu0 %v876
        %878 = vmatprep.subr.mxu0 0.0
        %v879 = vand.u32 %v247, 4294901760
        %880 = vmatpush1.msra.mxu0 %v879
        %881 = vmatprep.subr.mxu0 0.0
        %v882 = vand.u32 %v248, 4294901760
        %883 = vmatpush1.msra.mxu0 %v882
        %884 = vmatprep.subr.mxu0 0.0
        %v885 = vand.u32 %v249, 4294901760
        %886 = vmatpush1.msra.mxu0 %v885
        %887 = vmatprep.subr.mxu0 0.0
        %v888 = vand.u32 %v250, 4294901760
        %889 = vmatpush1.msra.mxu0 %v888
        %890 = vmatprep.subr.mxu0 0.0
        %891 = vmatpush1.msra.mxu0 0.0
        %892 = vmatprep.subr.mxu0 0.0
        %893 = vmatpush1.msra.mxu0 0.0
        %894 = vmatprep.subr.mxu0 0.0
        %895 = vmatpush1.msra.mxu0 0.0
        %896 = vmatprep.subr.mxu0 0.0
        %897 = vmatpush1.msra.mxu0 0.0
        %898 = vmatprep.subr.mxu0 0.0
        %899 = vmatpush1.msra.mxu0 0.0
        %900 = vmatprep.subr.mxu0 0.0
        %901 = vmatpush1.msra.mxu0 0.0
        %902 = vmatprep.subr.mxu0 0.0
        %903 = vmatpush1.msra.mxu0 0.0
        %904 = vmatprep.subr.mxu0 0.0
        %905 = vmatpush1.msra.mxu0 0.0
        %906 = vmatprep.subr.mxu0 0.0
        %907 = vmatpush1.msra.mxu0 0.0
        %908 = vmatprep.subr.mxu0 0.0
        %909 = vmatpush1.msra.mxu0 0.0
        %910 = vmatprep.subr.mxu0 0.0
        %911 = vmatpush1.msra.mxu0 0.0
        %912 = vmatprep.subr.mxu0 0.0
        %913 = vmatpush1.msra.mxu0 0.0
        %914 = vmatprep.subr.mxu0 0.0
        %915 = vmatpush1.msra.mxu0 0.0
        %916 = vmatprep.subr.mxu0 0.0
        %917 = vmatpush1.msra.mxu0 0.0
        %918 = vmatprep.subr.mxu0 0.0
        %919 = vmatpush1.msra.mxu0 0.0
        %920 = vmatprep.subr.mxu0 0.0
        %921 = vmatpush1.msra.mxu0 0.0
        %922 = vmatprep.mubr.f32.mxu0 0.0
        %v923 = vand.u32 %v233, 4294901760
        %924 = vmatmul.mubr.f32.gmra.mrb[0].mxu0 %v923
        %v925 = vpop.f32.mrb[0].mxu0
        %v926 = vadd.f32 %v833, %v925
        %v927 = vpop.f32.mrb[0].mxu0
        %928 = vmatprep.mubr.f32.mxu0 0.0
        %v929 = vand.u32 %v234, 4294901760
        %930 = vmatmul.mubr.f32.gmra.mrb[0].mxu0 %v929
        %v931 = vpop.f32.mrb[0].mxu0
        %v932 = vadd.f32 %v839, %v931
        %v933 = vpop.f32.mrb[0].mxu0
        %934 = vdwg.mxu0
        %v935 = vsub.f32 %v233, %v926
        %v936 = vsub.f32 %v234, %v932
        %v937 = vmul.f32 %v935, %v935
        %v938 = vmul.f32 %v936, %v936
        %939 = vmatprep.subr.mxu0 0.0
        %v940 = vand.u32 %v235, 4294901760
        %941 = vmatpush1.msra.mxu0 %v940
        %942 = vmatprep.subr.mxu0 0.0
        %v943 = vand.u32 %v236, 4294901760
        %944 = vmatpush1.msra.mxu0 %v943
        %945 = vmatprep.subr.mxu0 0.0
        %v946 = vand.u32 %v237, 4294901760
        %947 = vmatpush1.msra.mxu0 %v946
        %948 = vmatprep.subr.mxu0 0.0
        %v949 = vand.u32 %v238, 4294901760
        %950 = vmatpush1.msra.mxu0 %v949
        %951 = vmatprep.subr.mxu0 0.0
        %v952 = vand.u32 %v239, 4294901760
        %953 = vmatpush1.msra.mxu0 %v952
        %954 = vmatprep.subr.mxu0 0.0
        %v955 = vand.u32 %v240, 4294901760
        %956 = vmatpush1.msra.mxu0 %v955
        %957 = vmatprep.subr.mxu0 0.0
        %v958 = vand.u32 %v241, 4294901760
        %959 = vmatpush1.msra.mxu0 %v958
        %960 = vmatprep.subr.mxu0 0.0
        %v961 = vand.u32 %v242, 4294901760
        %962 = vmatpush1.msra.mxu0 %v961
        %963 = vmatprep.subr.mxu0 0.0
        %v964 = vand.u32 %v243, 4294901760
        %965 = vmatpush1.msra.mxu0 %v964
        %966 = vmatprep.subr.mxu0 0.0
        %v967 = vand.u32 %v244, 4294901760
        %968 = vmatpush1.msra.mxu0 %v967
        %969 = vmatprep.subr.mxu0 0.0
        %v970 = vand.u32 %v245, 4294901760
        %971 = vmatpush1.msra.mxu0 %v970
        %972 = vmatprep.subr.mxu0 0.0
        %v973 = vand.u32 %v246, 4294901760
        %974 = vmatpush1.msra.mxu0 %v973
        %975 = vmatprep.subr.mxu0 0.0
        %v976 = vand.u32 %v247, 4294901760
        %977 = vmatpush1.msra.mxu0 %v976
        %978 = vmatprep.subr.mxu0 0.0
        %v979 = vand.u32 %v248, 4294901760
        %980 = vmatpush1.msra.mxu0 %v979
        %981 = vmatprep.subr.mxu0 0.0
        %v982 = vand.u32 %v249, 4294901760
        %983 = vmatpush1.msra.mxu0 %v982
        %984 = vmatprep.subr.mxu0 0.0
        %v985 = vand.u32 %v250, 4294901760
        %986 = vmatpush1.msra.mxu0 %v985
        %987 = vmatprep.subr.mxu0 0.0
        %988 = vmatpush1.msra.mxu0 0.0
        %989 = vmatprep.subr.mxu0 0.0
        %990 = vmatpush1.msra.mxu0 0.0
        %991 = vmatprep.subr.mxu0 0.0
        %992 = vmatpush1.msra.mxu0 0.0
        %993 = vmatprep.subr.mxu0 0.0
        %994 = vmatpush1.msra.mxu0 0.0
        %995 = vmatprep.subr.mxu0 0.0
        %996 = vmatpush1.msra.mxu0 0.0
        %997 = vmatprep.subr.mxu0 0.0
        %998 = vmatpush1.msra.mxu0 0.0
        %999 = vmatprep.subr.mxu0 0.0
        %1000 = vmatpush1.msra.mxu0 0.0
        %1001 = vmatprep.subr.mxu0 0.0
        %1002 = vmatpush1.msra.mxu0 0.0
        %1003 = vmatprep.subr.mxu0 0.0
        %1004 = vmatpush1.msra.mxu0 0.0
        %1005 = vmatprep.subr.mxu0 0.0
        %1006 = vmatpush1.msra.mxu0 0.0
        %1007 = vmatprep.subr.mxu0 0.0
        %1008 = vmatpush1.msra.mxu0 0.0
        %1009 = vmatprep.subr.mxu0 0.0
        %1010 = vmatpush1.msra.mxu0 0.0
        %1011 = vmatprep.subr.mxu0 0.0
        %1012 = vmatpush1.msra.mxu0 0.0
        %1013 = vmatprep.subr.mxu0 0.0
        %1014 = vmatpush1.msra.mxu0 0.0
        %1015 = vmatprep.subr.mxu0 0.0
        %1016 = vmatpush1.msra.mxu0 0.0
        %1017 = vmatprep.subr.mxu0 0.0
        %1018 = vmatpush1.msra.mxu0 0.0
        %1019 = vmatprep.mubr.f32.mxu0 0.0
        %v1020 = vand.u32 %v937, 4294901760
        %v1021 = vsub.f32 %v937, %v1020
        %v1022 = vand.u32 %v1021, 4294901760
        %v1023 = vsub.f32 %v1021, %v1022
        %v1024 = vand.u32 %v1023, 4294901760
        %1025 = vmatmul.mubr.f32.gmra.mrb[0].mxu0 %v1024
        %v1026 = vpop.f32.mrb[0].mxu0
        %v1027 = vadd.f32 1e-05, %v1026
        %v1028 = vpop.f32.mrb[0].mxu0
        %1029 = vmatprep.mubr.f32.mxu0 0.0
        %v1030 = vand.u32 %v938, 4294901760
        %v1031 = vsub.f32 %v938, %v1030
        %v1032 = vand.u32 %v1031, 4294901760
        %v1033 = vsub.f32 %v1031, %v1032
        %v1034 = vand.u32 %v1033, 4294901760
        %1035 = vmatmul.mubr.f32.gmra.mrb[0].mxu0 %v1034
        %v1036 = vpop.f32.mrb[0].mxu0
        %v1037 = vadd.f32 1e-05, %v1036
        %v1038 = vpop.f32.mrb[0].mxu0
        %1039 = vdwg.mxu0
        %1040 = vmatprep.subr.mxu0 0.0
        %v1041 = vand.u32 %v235, 4294901760
        %v1042 = vsub.f32 %v235, %v1041
        %v1043 = vand.u32 %v1042, 4294901760
        %v1044 = vsub.f32 %v1042, %v1043
        %v1045 = vand.u32 %v1044, 4294901760
        %1046 = vmatpush1.msra.mxu0 %v1045
        %1047 = vmatprep.subr.mxu0 0.0
        %v1048 = vand.u32 %v236, 4294901760
        %v1049 = vsub.f32 %v236, %v1048
        %v1050 = vand.u32 %v1049, 4294901760
        %v1051 = vsub.f32 %v1049, %v1050
        %v1052 = vand.u32 %v1051, 4294901760
        %1053 = vmatpush1.msra.mxu0 %v1052
        %1054 = vmatprep.subr.mxu0 0.0
        %v1055 = vand.u32 %v237, 4294901760
        %v1056 = vsub.f32 %v237, %v1055
        %v1057 = vand.u32 %v1056, 4294901760
        %v1058 = vsub.f32 %v1056, %v1057
        %v1059 = vand.u32 %v1058, 4294901760
        %1060 = vmatpush1.msra.mxu0 %v1059
        %1061 = vmatprep.subr.mxu0 0.0
        %v1062 = vand.u32 %v238, 4294901760
        %v1063 = vsub.f32 %v238, %v1062
        %v1064 = vand.u32 %v1063, 4294901760
        %v1065 = vsub.f32 %v1063, %v1064
        %v1066 = vand.u32 %v1065, 4294901760
        %1067 = vmatpush1.msra.mxu0 %v1066
        %1068 = vmatprep.subr.mxu0 0.0
        %v1069 = vand.u32 %v239, 4294901760
        %v1070 = vsub.f32 %v239, %v1069
        %v1071 = vand.u32 %v1070, 4294901760
        %v1072 = vsub.f32 %v1070, %v1071
        %v1073 = vand.u32 %v1072, 4294901760
        %1074 = vmatpush1.msra.mxu0 %v1073
        %1075 = vmatprep.subr.mxu0 0.0
        %v1076 = vand.u32 %v240, 4294901760
        %v1077 = vsub.f32 %v240, %v1076
        %v1078 = vand.u32 %v1077, 4294901760
        %v1079 = vsub.f32 %v1077, %v1078
        %v1080 = vand.u32 %v1079, 4294901760
        %1081 = vmatpush1.msra.mxu0 %v1080
        %1082 = vmatprep.subr.mxu0 0.0
        %v1083 = vand.u32 %v241, 4294901760
        %v1084 = vsub.f32 %v241, %v1083
        %v1085 = vand.u32 %v1084, 4294901760
        %v1086 = vsub.f32 %v1084, %v1085
        %v1087 = vand.u32 %v1086, 4294901760
        %1088 = vmatpush1.msra.mxu0 %v1087
        %1089 = vmatprep.subr.mxu0 0.0
        %v1090 = vand.u32 %v242, 4294901760
        %v1091 = vsub.f32 %v242, %v1090
        %v1092 = vand.u32 %v1091, 4294901760
        %v1093 = vsub.f32 %v1091, %v1092
        %v1094 = vand.u32 %v1093, 4294901760
        %1095 = vmatpush1.msra.mxu0 %v1094
        %1096 = vmatprep.subr.mxu0 0.0
        %v1097 = vand.u32 %v243, 4294901760
        %v1098 = vsub.f32 %v243, %v1097
        %v1099 = vand.u32 %v1098, 4294901760
        %v1100 = vsub.f32 %v1098, %v1099
        %v1101 = vand.u32 %v1100, 4294901760
        %1102 = vmatpush1.msra.mxu0 %v1101
        %1103 = vmatprep.subr.mxu0 0.0
        %v1104 = vand.u32 %v244, 4294901760
        %v1105 = vsub.f32 %v244, %v1104
        %v1106 = vand.u32 %v1105, 4294901760
        %v1107 = vsub.f32 %v1105, %v1106
        %v1108 = vand.u32 %v1107, 4294901760
        %1109 = vmatpush1.msra.mxu0 %v1108
        %1110 = vmatprep.subr.mxu0 0.0
        %v1111 = vand.u32 %v245, 4294901760
        %v1112 = vsub.f32 %v245, %v1111
        %v1113 = vand.u32 %v1112, 4294901760
        %v1114 = vsub.f32 %v1112, %v1113
        %v1115 = vand.u32 %v1114, 4294901760
        %1116 = vmatpush1.msra.mxu0 %v1115
        %1117 = vmatprep.subr.mxu0 0.0
        %v1118 = vand.u32 %v246, 4294901760
        %v1119 = vsub.f32 %v246, %v1118
        %v1120 = vand.u32 %v1119, 4294901760
        %v1121 = vsub.f32 %v1119, %v1120
        %v1122 = vand.u32 %v1121, 4294901760
        %1123 = vmatpush1.msra.mxu0 %v1122
        %1124 = vmatprep.subr.mxu0 0.0
        %v1125 = vand.u32 %v247, 4294901760
        %v1126 = vsub.f32 %v247, %v1125
        %v1127 = vand.u32 %v1126, 4294901760
        %v1128 = vsub.f32 %v1126, %v1127
        %v1129 = vand.u32 %v1128, 4294901760
        %1130 = vmatpush1.msra.mxu0 %v1129
        %1131 = vmatprep.subr.mxu0 0.0
        %v1132 = vand.u32 %v248, 4294901760
        %v1133 = vsub.f32 %v248, %v1132
        %v1134 = vand.u32 %v1133, 4294901760
        %v1135 = vsub.f32 %v1133, %v1134
        %v1136 = vand.u32 %v1135, 4294901760
        %1137 = vmatpush1.msra.mxu0 %v1136
        %1138 = vmatprep.subr.mxu0 0.0
        %v1139 = vand.u32 %v249, 4294901760
        %v1140 = vsub.f32 %v249, %v1139
        %v1141 = vand.u32 %v1140, 4294901760
        %v1142 = vsub.f32 %v1140, %v1141
        %v1143 = vand.u32 %v1142, 4294901760
        %1144 = vmatpush1.msra.mxu0 %v1143
        %1145 = vmatprep.subr.mxu0 0.0
        %v1146 = vand.u32 %v250, 4294901760
        %v1147 = vsub.f32 %v250, %v1146
        %v1148 = vand.u32 %v1147, 4294901760
        %v1149 = vsub.f32 %v1147, %v1148
        %v1150 = vand.u32 %v1149, 4294901760
        %1151 = vmatpush1.msra.mxu0 %v1150
        %1152 = vmatprep.subr.mxu0 0.0
        %1153 = vmatpush1.msra.mxu0 0.0
        %1154 = vmatprep.subr.mxu0 0.0
        %1155 = vmatpush1.msra.mxu0 0.0
        %1156 = vmatprep.subr.mxu0 0.0
        %1157 = vmatpush1.msra.mxu0 0.0
        %1158 = vmatprep.subr.mxu0 0.0
        %1159 = vmatpush1.msra.mxu0 0.0
        %1160 = vmatprep.subr.mxu0 0.0
        %1161 = vmatpush1.msra.mxu0 0.0
        %1162 = vmatprep.subr.mxu0 0.0
        %1163 = vmatpush1.msra.mxu0 0.0
        %1164 = vmatprep.subr.mxu0 0.0
        %1165 = vmatpush1.msra.mxu0 0.0
        %1166 = vmatprep.subr.mxu0 0.0
        %1167 = vmatpush1.msra.mxu0 0.0
        %1168 = vmatprep.subr.mxu0 0.0
        %1169 = vmatpush1.msra.mxu0 0.0
        %1170 = vmatprep.subr.mxu0 0.0
        %1171 = vmatpush1.msra.mxu0 0.0
        %1172 = vmatprep.subr.mxu0 0.0
        %1173 = vmatpush1.msra.mxu0 0.0
        %1174 = vmatprep.subr.mxu0 0.0
        %1175 = vmatpush1.msra.mxu0 0.0
        %1176 = vmatprep.subr.mxu0 0.0
        %1177 = vmatpush1.msra.mxu0 0.0
        %1178 = vmatprep.subr.mxu0 0.0
        %1179 = vmatpush1.msra.mxu0 0.0
        %1180 = vmatprep.subr.mxu0 0.0
        %1181 = vmatpush1.msra.mxu0 0.0
        %1182 = vmatprep.subr.mxu0 0.0
        %1183 = vmatpush1.msra.mxu0 0.0
        %1184 = vmatprep.mubr.f32.mxu0 0.0
        %v1185 = vand.u32 %v937, 4294901760
        %1186 = vmatmul.mubr.f32.gmra.mrb[0].mxu0 %v1185
        %v1187 = vpop.f32.mrb[0].mxu0
        %v1188 = vadd.f32 %v1027, %v1187
        %v1189 = vpop.f32.mrb[0].mxu0
        %1190 = vmatprep.mubr.f32.mxu0 0.0
        %v1191 = vand.u32 %v938, 4294901760
        %1192 = vmatmul.mubr.f32.gmra.mrb[0].mxu0 %v1191
        %v1193 = vpop.f32.mrb[0].mxu0
        %v1194 = vadd.f32 %v1037, %v1193
        %v1195 = vpop.f32.mrb[0].mxu0
        %1196 = vdwg.mxu0
        %1197 = vmatprep.subr.mxu0 0.0
        %v1198 = vand.u32 %v235, 4294901760
        %v1199 = vsub.f32 %v235, %v1198
        %1200 = vmatpush1.msra.mxu0 %v1199
        %1201 = vmatprep.subr.mxu0 0.0
        %v1202 = vand.u32 %v236, 4294901760
        %v1203 = vsub.f32 %v236, %v1202
        %1204 = vmatpush1.msra.mxu0 %v1203
        %1205 = vmatprep.subr.mxu0 0.0
        %v1206 = vand.u32 %v237, 4294901760
        %v1207 = vsub.f32 %v237, %v1206
        %1208 = vmatpush1.msra.mxu0 %v1207
        %1209 = vmatprep.subr.mxu0 0.0
        %v1210 = vand.u32 %v238, 4294901760
        %v1211 = vsub.f32 %v238, %v1210
        %1212 = vmatpush1.msra.mxu0 %v1211
        %1213 = vmatprep.subr.mxu0 0.0
        %v1214 = vand.u32 %v239, 4294901760
        %v1215 = vsub.f32 %v239, %v1214
        %1216 = vmatpush1.msra.mxu0 %v1215
        %1217 = vmatprep.subr.mxu0 0.0
        %v1218 = vand.u32 %v240, 4294901760
        %v1219 = vsub.f32 %v240, %v1218
        %1220 = vmatpush1.msra.mxu0 %v1219
        %1221 = vmatprep.subr.mxu0 0.0
        %v1222 = vand.u32 %v241, 4294901760
        %v1223 = vsub.f32 %v241, %v1222
        %1224 = vmatpush1.msra.mxu0 %v1223
        %1225 = vmatprep.subr.mxu0 0.0
        %v1226 = vand.u32 %v242, 4294901760
        %v1227 = vsub.f32 %v242, %v1226
        %1228 = vmatpush1.msra.mxu0 %v1227
        %1229 = vmatprep.subr.mxu0 0.0
        %v1230 = vand.u32 %v243, 4294901760
        %v1231 = vsub.f32 %v243, %v1230
        %1232 = vmatpush1.msra.mxu0 %v1231
        %1233 = vmatprep.subr.mxu0 0.0
        %v1234 = vand.u32 %v244, 4294901760
        %v1235 = vsub.f32 %v244, %v1234
        %1236 = vmatpush1.msra.mxu0 %v1235
        %1237 = vmatprep.subr.mxu0 0.0
        %v1238 = vand.u32 %v245, 4294901760
        %v1239 = vsub.f32 %v245, %v1238
        %1240 = vmatpush1.msra.mxu0 %v1239
        %1241 = vmatprep.subr.mxu0 0.0
        %v1242 = vand.u32 %v246, 4294901760
        %v1243 = vsub.f32 %v246, %v1242
        %1244 = vmatpush1.msra.mxu0 %v1243
        %1245 = vmatprep.subr.mxu0 0.0
        %v1246 = vand.u32 %v247, 4294901760
        %v1247 = vsub.f32 %v247, %v1246
        %1248 = vmatpush1.msra.mxu0 %v1247
        %1249 = vmatprep.subr.mxu0 0.0
        %v1250 = vand.u32 %v248, 4294901760
        %v1251 = vsub.f32 %v248, %v1250
        %1252 = vmatpush1.msra.mxu0 %v1251
        %1253 = vmatprep.subr.mxu0 0.0
        %v1254 = vand.u32 %v249, 4294901760
        %v1255 = vsub.f32 %v249, %v1254
        %1256 = vmatpush1.msra.mxu0 %v1255
        %1257 = vmatprep.subr.mxu0 0.0
        %v1258 = vand.u32 %v250, 4294901760
        %v1259 = vsub.f32 %v250, %v1258
        %1260 = vmatpush1.msra.mxu0 %v1259
        %1261 = vmatprep.subr.mxu0 0.0
        %1262 = vmatpush1.msra.mxu0 0.0
        %1263 = vmatprep.subr.mxu0 0.0
        %1264 = vmatpush1.msra.mxu0 0.0
        %1265 = vmatprep.subr.mxu0 0.0
        %1266 = vmatpush1.msra.mxu0 0.0
        %1267 = vmatprep.subr.mxu0 0.0
        %1268 = vmatpush1.msra.mxu0 0.0
        %1269 = vmatprep.subr.mxu0 0.0
        %1270 = vmatpush1.msra.mxu0 0.0
        %1271 = vmatprep.subr.mxu0 0.0
        %1272 = vmatpush1.msra.mxu0 0.0
        %1273 = vmatprep.subr.mxu0 0.0
        %1274 = vmatpush1.msra.mxu0 0.0
        %1275 = vmatprep.subr.mxu0 0.0
        %1276 = vmatpush1.msra.mxu0 0.0
        %1277 = vmatprep.subr.mxu0 0.0
        %1278 = vmatpush1.msra.mxu0 0.0
        %1279 = vmatprep.subr.mxu0 0.0
        %1280 = vmatpush1.msra.mxu0 0.0
        %1281 = vmatprep.subr.mxu0 0.0
        %1282 = vmatpush1.msra.mxu0 0.0
        %1283 = vmatprep.subr.mxu0 0.0
        %1284 = vmatpush1.msra.mxu0 0.0
        %1285 = vmatprep.subr.mxu0 0.0
        %1286 = vmatpush1.msra.mxu0 0.0
        %1287 = vmatprep.subr.mxu0 0.0
        %1288 = vmatpush1.msra.mxu0 0.0
        %1289 = vmatprep.subr.mxu0 0.0
        %1290 = vmatpush1.msra.mxu0 0.0
        %1291 = vmatprep.subr.mxu0 0.0
        %1292 = vmatpush1.msra.mxu0 0.0
        %1293 = vmatprep.mubr.f32.mxu0 0.0
        %v1294 = vand.u32 %v937, 4294901760
        %v1295 = vsub.f32 %v937, %v1294
        %1296 = vmatmul.mubr.f32.gmra.mrb[0].mxu0 %v1295
        %v1297 = vpop.f32.mrb[0].mxu0
        %v1298 = vadd.f32 %v1188, %v1297
        %v1299 = vpop.f32.mrb[0].mxu0
        %1300 = vmatprep.mubr.f32.mxu0 0.0
        %v1301 = vand.u32 %v938, 4294901760
        %v1302 = vsub.f32 %v938, %v1301
        %1303 = vmatmul.mubr.f32.gmra.mrb[0].mxu0 %v1302
        %v1304 = vpop.f32.mrb[0].mxu0
        %v1305 = vadd.f32 %v1194, %v1304
        %v1306 = vpop.f32.mrb[0].mxu0
        %1307 = vdwg.mxu0
        %1308 = vmatprep.subr.mxu0 0.0
        %v1309 = vand.u32 %v235, 4294901760
        %1310 = vmatpush1.msra.mxu0 %v1309
        %1311 = vmatprep.subr.mxu0 0.0
        %v1312 = vand.u32 %v236, 4294901760
        %1313 = vmatpush1.msra.mxu0 %v1312
        %1314 = vmatprep.subr.mxu0 0.0
        %v1315 = vand.u32 %v237, 4294901760
        %1316 = vmatpush1.msra.mxu0 %v1315
        %1317 = vmatprep.subr.mxu0 0.0
        %v1318 = vand.u32 %v238, 4294901760
        %1319 = vmatpush1.msra.mxu0 %v1318
        %1320 = vmatprep.subr.mxu0 0.0
        %v1321 = vand.u32 %v239, 4294901760
        %1322 = vmatpush1.msra.mxu0 %v1321
        %1323 = vmatprep.subr.mxu0 0.0
        %v1324 = vand.u32 %v240, 4294901760
        %1325 = vmatpush1.msra.mxu0 %v1324
        %1326 = vmatprep.subr.mxu0 0.0
        %v1327 = vand.u32 %v241, 4294901760
        %1328 = vmatpush1.msra.mxu0 %v1327
        %1329 = vmatprep.subr.mxu0 0.0
        %v1330 = vand.u32 %v242, 4294901760
        %1331 = vmatpush1.msra.mxu0 %v1330
        %1332 = vmatprep.subr.mxu0 0.0
        %v1333 = vand.u32 %v243, 4294901760
        %1334 = vmatpush1.msra.mxu0 %v1333
        %1335 = vmatprep.subr.mxu0 0.0
        %v1336 = vand.u32 %v244, 4294901760
        %1337 = vmatpush1.msra.mxu0 %v1336
        %1338 = vmatprep.subr.mxu0 0.0
        %v1339 = vand.u32 %v245, 4294901760
        %1340 = vmatpush1.msra.mxu0 %v1339
        %1341 = vmatprep.subr.mxu0 0.0
        %v1342 = vand.u32 %v246, 4294901760
        %1343 = vmatpush1.msra.mxu0 %v1342
        %1344 = vmatprep.subr.mxu0 0.0
        %v1345 = vand.u32 %v247, 4294901760
        %1346 = vmatpush1.msra.mxu0 %v1345
        %1347 = vmatprep.subr.mxu0 0.0
        %v1348 = vand.u32 %v248, 4294901760
        %1349 = vmatpush1.msra.mxu0 %v1348
        %1350 = vmatprep.subr.mxu0 0.0
        %v1351 = vand.u32 %v249, 4294901760
        %1352 = vmatpush1.msra.mxu0 %v1351
        %1353 = vmatprep.subr.mxu0 0.0
        %v1354 = vand.u32 %v250, 4294901760
        %1355 = vmatpush1.msra.mxu0 %v1354
        %1356 = vmatprep.subr.mxu0 0.0
        %1357 = vmatpush1.msra.mxu0 0.0
        %1358 = vmatprep.subr.mxu0 0.0
        %1359 = vmatpush1.msra.mxu0 0.0
        %1360 = vmatprep.subr.mxu0 0.0
        %1361 = vmatpush1.msra.mxu0 0.0
        %1362 = vmatprep.subr.mxu0 0.0
        %1363 = vmatpush1.msra.mxu0 0.0
        %1364 = vmatprep.subr.mxu0 0.0
        %1365 = vmatpush1.msra.mxu0 0.0
        %1366 = vmatprep.subr.mxu0 0.0
        %1367 = vmatpush1.msra.mxu0 0.0
        %1368 = vmatprep.subr.mxu0 0.0
        %1369 = vmatpush1.msra.mxu0 0.0
        %1370 = vmatprep.subr.mxu0 0.0
        %1371 = vmatpush1.msra.mxu0 0.0
        %1372 = vmatprep.subr.mxu0 0.0
        %1373 = vmatpush1.msra.mxu0 0.0
        %1374 = vmatprep.subr.mxu0 0.0
        %1375 = vmatpush1.msra.mxu0 0.0
        %1376 = vmatprep.subr.mxu0 0.0
        %1377 = vmatpush1.msra.mxu0 0.0
        %1378 = vmatprep.subr.mxu0 0.0
        %1379 = vmatpush1.msra.mxu0 0.0
        %1380 = vmatprep.subr.mxu0 0.0
        %1381 = vmatpush1.msra.mxu0 0.0
        %1382 = vmatprep.subr.mxu0 0.0
        %1383 = vmatpush1.msra.mxu0 0.0
        %1384 = vmatprep.subr.mxu0 0.0
        %1385 = vmatpush1.msra.mxu0 0.0
        %1386 = vmatprep.subr.mxu0 0.0
        %1387 = vmatpush1.msra.mxu0 0.0
        %1388 = vmatprep.mubr.f32.mxu0 0.0
        %v1389 = vand.u32 %v937, 4294901760
        %v1390 = vsub.f32 %v937, %v1389
        %v1391 = vand.u32 %v1390, 4294901760
        %1392 = vmatmul.mubr.f32.gmra.mrb[0].mxu0 %v1391
        %v1393 = vpop.f32.mrb[0].mxu0
        %v1394 = vadd.f32 %v1298, %v1393
        %v1395 = vpop.f32.mrb[0].mxu0
        %1396 = vmatprep.mubr.f32.mxu0 0.0
        %v1397 = vand.u32 %v938, 4294901760
        %v1398 = vsub.f32 %v938, %v1397
        %v1399 = vand.u32 %v1398, 4294901760
        %1400 = vmatmul.mubr.f32.gmra.mrb[0].mxu0 %v1399
        %v1401 = vpop.f32.mrb[0].mxu0
        %v1402 = vadd.f32 %v1305, %v1401
        %v1403 = vpop.f32.mrb[0].mxu0
        %1404 = vdwg.mxu0
        %1405 = vmatprep.subr.mxu0 0.0
        %v1406 = vand.u32 %v235, 4294901760
        %v1407 = vsub.f32 %v235, %v1406
        %v1408 = vand.u32 %v1407, 4294901760
        %1409 = vmatpush1.msra.mxu0 %v1408
        %1410 = vmatprep.subr.mxu0 0.0
        %v1411 = vand.u32 %v236, 4294901760
        %v1412 = vsub.f32 %v236, %v1411
        %v1413 = vand.u32 %v1412, 4294901760
        %1414 = vmatpush1.msra.mxu0 %v1413
        %1415 = vmatprep.subr.mxu0 0.0
        %v1416 = vand.u32 %v237, 4294901760
        %v1417 = vsub.f32 %v237, %v1416
        %v1418 = vand.u32 %v1417, 4294901760
        %1419 = vmatpush1.msra.mxu0 %v1418
        %1420 = vmatprep.subr.mxu0 0.0
        %v1421 = vand.u32 %v238, 4294901760
        %v1422 = vsub.f32 %v238, %v1421
        %v1423 = vand.u32 %v1422, 4294901760
        %1424 = vmatpush1.msra.mxu0 %v1423
        %1425 = vmatprep.subr.mxu0 0.0
        %v1426 = vand.u32 %v239, 4294901760
        %v1427 = vsub.f32 %v239, %v1426
        %v1428 = vand.u32 %v1427, 4294901760
        %1429 = vmatpush1.msra.mxu0 %v1428
        %1430 = vmatprep.subr.mxu0 0.0
        %v1431 = vand.u32 %v240, 4294901760
        %v1432 = vsub.f32 %v240, %v1431
        %v1433 = vand.u32 %v1432, 4294901760
        %1434 = vmatpush1.msra.mxu0 %v1433
        %1435 = vmatprep.subr.mxu0 0.0
        %v1436 = vand.u32 %v241, 4294901760
        %v1437 = vsub.f32 %v241, %v1436
        %v1438 = vand.u32 %v1437, 4294901760
        %1439 = vmatpush1.msra.mxu0 %v1438
        %1440 = vmatprep.subr.mxu0 0.0
        %v1441 = vand.u32 %v242, 4294901760
        %v1442 = vsub.f32 %v242, %v1441
        %v1443 = vand.u32 %v1442, 4294901760
        %1444 = vmatpush1.msra.mxu0 %v1443
        %1445 = vmatprep.subr.mxu0 0.0
        %v1446 = vand.u32 %v243, 4294901760
        %v1447 = vsub.f32 %v243, %v1446
        %v1448 = vand.u32 %v1447, 4294901760
        %1449 = vmatpush1.msra.mxu0 %v1448
        %1450 = vmatprep.subr.mxu0 0.0
        %v1451 = vand.u32 %v244, 4294901760
        %v1452 = vsub.f32 %v244, %v1451
        %v1453 = vand.u32 %v1452, 4294901760
        %1454 = vmatpush1.msra.mxu0 %v1453
        %1455 = vmatprep.subr.mxu0 0.0
        %v1456 = vand.u32 %v245, 4294901760
        %v1457 = vsub.f32 %v245, %v1456
        %v1458 = vand.u32 %v1457, 4294901760
        %1459 = vmatpush1.msra.mxu0 %v1458
        %1460 = vmatprep.subr.mxu0 0.0
        %v1461 = vand.u32 %v246, 4294901760
        %v1462 = vsub.f32 %v246, %v1461
        %v1463 = vand.u32 %v1462, 4294901760
        %1464 = vmatpush1.msra.mxu0 %v1463
        %1465 = vmatprep.subr.mxu0 0.0
        %v1466 = vand.u32 %v247, 4294901760
        %v1467 = vsub.f32 %v247, %v1466
        %v1468 = vand.u32 %v1467, 4294901760
        %1469 = vmatpush1.msra.mxu0 %v1468
        %1470 = vmatprep.subr.mxu0 0.0
        %v1471 = vand.u32 %v248, 4294901760
        %v1472 = vsub.f32 %v248, %v1471
        %v1473 = vand.u32 %v1472, 4294901760
        %1474 = vmatpush1.msra.mxu0 %v1473
        %1475 = vmatprep.subr.mxu0 0.0
        %v1476 = vand.u32 %v249, 4294901760
        %v1477 = vsub.f32 %v249, %v1476
        %v1478 = vand.u32 %v1477, 4294901760
        %1479 = vmatpush1.msra.mxu0 %v1478
        %1480 = vmatprep.subr.mxu0 0.0
        %v1481 = vand.u32 %v250, 4294901760
        %v1482 = vsub.f32 %v250, %v1481
        %v1483 = vand.u32 %v1482, 4294901760
        %1484 = vmatpush1.msra.mxu0 %v1483
        %1485 = vmatprep.subr.mxu0 0.0
        %1486 = vmatpush1.msra.mxu0 0.0
        %1487 = vmatprep.subr.mxu0 0.0
        %1488 = vmatpush1.msra.mxu0 0.0
        %1489 = vmatprep.subr.mxu0 0.0
        %1490 = vmatpush1.msra.mxu0 0.0
        %1491 = vmatprep.subr.mxu0 0.0
        %1492 = vmatpush1.msra.mxu0 0.0
        %1493 = vmatprep.subr.mxu0 0.0
        %1494 = vmatpush1.msra.mxu0 0.0
        %1495 = vmatprep.subr.mxu0 0.0
        %1496 = vmatpush1.msra.mxu0 0.0
        %1497 = vmatprep.subr.mxu0 0.0
        %1498 = vmatpush1.msra.mxu0 0.0
        %1499 = vmatprep.subr.mxu0 0.0
        %1500 = vmatpush1.msra.mxu0 0.0
        %1501 = vmatprep.subr.mxu0 0.0
        %1502 = vmatpush1.msra.mxu0 0.0
        %1503 = vmatprep.subr.mxu0 0.0
        %1504 = vmatpush1.msra.mxu0 0.0
        %1505 = vmatprep.subr.mxu0 0.0
        %1506 = vmatpush1.msra.mxu0 0.0
        %1507 = vmatprep.subr.mxu0 0.0
        %1508 = vmatpush1.msra.mxu0 0.0
        %1509 = vmatprep.subr.mxu0 0.0
        %1510 = vmatpush1.msra.mxu0 0.0
        %1511 = vmatprep.subr.mxu0 0.0
        %1512 = vmatpush1.msra.mxu0 0.0
        %1513 = vmatprep.subr.mxu0 0.0
        %1514 = vmatpush1.msra.mxu0 0.0
        %1515 = vmatprep.subr.mxu0 0.0
        %1516 = vmatpush1.msra.mxu0 0.0
        %1517 = vmatprep.mubr.f32.mxu0 0.0
        %v1518 = vand.u32 %v937, 4294901760
        %1519 = vmatmul.mubr.f32.gmra.mrb[0].mxu0 %v1518
        %v1520 = vpop.f32.mrb[0].mxu0
        %v1521 = vadd.f32 %v1394, %v1520
        %v1522 = vpop.f32.mrb[0].mxu0
        %1523 = vmatprep.mubr.f32.mxu0 0.0
        %v1524 = vand.u32 %v938, 4294901760
        %1525 = vmatmul.mubr.f32.gmra.mrb[0].mxu0 %v1524
        %v1526 = vpop.f32.mrb[0].mxu0
        %v1527 = vadd.f32 %v1402, %v1526
        %v1528 = vpop.f32.mrb[0].mxu0
        %1529 = vdwg.mxu0
        %1530 = vmatprep.subr.mxu0 0.0
        %v1531 = vand.u32 %v235, 4294901760
        %1532 = vmatpush1.msra.mxu0 %v1531
        %1533 = vmatprep.subr.mxu0 0.0
        %v1534 = vand.u32 %v236, 4294901760
        %1535 = vmatpush1.msra.mxu0 %v1534
        %1536 = vmatprep.subr.mxu0 0.0
        %v1537 = vand.u32 %v237, 4294901760
        %1538 = vmatpush1.msra.mxu0 %v1537
        %1539 = vmatprep.subr.mxu0 0.0
        %v1540 = vand.u32 %v238, 4294901760
        %1541 = vmatpush1.msra.mxu0 %v1540
        %1542 = vmatprep.subr.mxu0 0.0
        %v1543 = vand.u32 %v239, 4294901760
        %1544 = vmatpush1.msra.mxu0 %v1543
        %1545 = vmatprep.subr.mxu0 0.0
        %v1546 = vand.u32 %v240, 4294901760
        %1547 = vmatpush1.msra.mxu0 %v1546
        %1548 = vmatprep.subr.mxu0 0.0
        %v1549 = vand.u32 %v241, 4294901760
        %1550 = vmatpush1.msra.mxu0 %v1549
        %1551 = vmatprep.subr.mxu0 0.0
        %v1552 = vand.u32 %v242, 4294901760
        %1553 = vmatpush1.msra.mxu0 %v1552
        %1554 = vmatprep.subr.mxu0 0.0
        %v1555 = vand.u32 %v243, 4294901760
        %1556 = vmatpush1.msra.mxu0 %v1555
        %1557 = vmatprep.subr.mxu0 0.0
        %v1558 = vand.u32 %v244, 4294901760
        %1559 = vmatpush1.msra.mxu0 %v1558
        %1560 = vmatprep.subr.mxu0 0.0
        %v1561 = vand.u32 %v245, 4294901760
        %1562 = vmatpush1.msra.mxu0 %v1561
        %1563 = vmatprep.subr.mxu0 0.0
        %v1564 = vand.u32 %v246, 4294901760
        %1565 = vmatpush1.msra.mxu0 %v1564
        %1566 = vmatprep.subr.mxu0 0.0
        %v1567 = vand.u32 %v247, 4294901760
        %1568 = vmatpush1.msra.mxu0 %v1567
        %1569 = vmatprep.subr.mxu0 0.0
        %v1570 = vand.u32 %v248, 4294901760
        %1571 = vmatpush1.msra.mxu0 %v1570
        %1572 = vmatprep.subr.mxu0 0.0
        %v1573 = vand.u32 %v249, 4294901760
        %1574 = vmatpush1.msra.mxu0 %v1573
        %1575 = vmatprep.subr.mxu0 0.0
        %v1576 = vand.u32 %v250, 4294901760
        %1577 = vmatpush1.msra.mxu0 %v1576
        %1578 = vmatprep.subr.mxu0 0.0
        %1579 = vmatpush1.msra.mxu0 0.0
        %1580 = vmatprep.subr.mxu0 0.0
        %1581 = vmatpush1.msra.mxu0 0.0
        %1582 = vmatprep.subr.mxu0 0.0
        %1583 = vmatpush1.msra.mxu0 0.0
        %1584 = vmatprep.subr.mxu0 0.0
        %1585 = vmatpush1.msra.mxu0 0.0
        %1586 = vmatprep.subr.mxu0 0.0
        %1587 = vmatpush1.msra.mxu0 0.0
        %1588 = vmatprep.subr.mxu0 0.0
        %1589 = vmatpush1.msra.mxu0 0.0
        %1590 = vmatprep.subr.mxu0 0.0
        %1591 = vmatpush1.msra.mxu0 0.0
        %1592 = vmatprep.subr.mxu0 0.0
        %1593 = vmatpush1.msra.mxu0 0.0
        %1594 = vmatprep.subr.mxu0 0.0
        %1595 = vmatpush1.msra.mxu0 0.0
        %1596 = vmatprep.subr.mxu0 0.0
        %1597 = vmatpush1.msra.mxu0 0.0
        %1598 = vmatprep.subr.mxu0 0.0
        %1599 = vmatpush1.msra.mxu0 0.0
        %1600 = vmatprep.subr.mxu0 0.0
        %1601 = vmatpush1.msra.mxu0 0.0
        %1602 = vmatprep.subr.mxu0 0.0
        %1603 = vmatpush1.msra.mxu0 0.0
        %1604 = vmatprep.subr.mxu0 0.0
        %1605 = vmatpush1.msra.mxu0 0.0
        %1606 = vmatprep.subr.mxu0 0.0
        %1607 = vmatpush1.msra.mxu0 0.0
        %1608 = vmatprep.subr.mxu0 0.0
        %1609 = vmatpush1.msra.mxu0 0.0
        %1610 = vmatprep.mubr.f32.mxu0 0.0
        %v1611 = vand.u32 %v937, 4294901760
        %1612 = vmatmul.mubr.f32.gmra.mrb[0].mxu0 %v1611
        %v1613 = vpop.f32.mrb[0].mxu0
        %v1614 = vadd.f32 %v1521, %v1613
        %v1615 = vpop.f32.mrb[0].mxu0
        %1616 = vmatprep.mubr.f32.mxu0 0.0
        %v1617 = vand.u32 %v938, 4294901760
        %1618 = vmatmul.mubr.f32.gmra.mrb[0].mxu0 %v1617
        %v1619 = vpop.f32.mrb[0].mxu0
        %v1620 = vadd.f32 %v1527, %v1619
        %v1621 = vpop.f32.mrb[0].mxu0
        %1622 = vdwg.mxu0
        %v1623 = vrsqrt.pop %v1614
        %v1624 = vrsqrt.pop %v1620
        %v1625 = vmul.f32 %v935, %v1623
        %v1626 = vmul.f32 %v936, %v1624
        %v1627 = vld [vmem:[%s2] sm:$0x1]
        %v1629 = vlaneseq
        %v1630 = vshrl.u32 %v1629, 7
        %v1631 = vsub.s32 0, %v1630
        %v1632 = vrot.slane %v1627, %v1631
        %v1634 = vmul.f32 %v1625, %v1632
        %v1635 = vmul.f32 %v1626, %v1632
        %v1636 = vld [vmem:[%s3] sm:$0x1]
        %v1638 = vlaneseq
        %v1639 = vshrl.u32 %v1638, 7
        %v1640 = vsub.s32 0, %v1639
        %v1641 = vrot.slane %v1636, %v1640
        %v1643 = vadd.f32 %v1634, %v1641
        %v1644 = vadd.f32 %v1635, %v1641
        %1645 = vst [vmem:[%s230] sm:$0xff] %v1643
        %1646 = vst [vmem:[%s230 + $0x8] sm:$0xff] %v1644
        %s1647 = sand.u32 %s119, 1
        %s1648 = scalar_lea.sflag [#allocation4], %s1647
        %s1649 = sand.u32 %s119, 1
        %s1650 = smul.addr %s1649, 16
        %s1651 = scalar_lea.vmem [#allocation7], %s1650
        // Predicated region
        $region45: #{tpu_custom_call.1} parent=35 // pred_check
          %p1652 = pneg %p129
        $region46: #{tpu_custom_call.1} parent=35 // pred_check_branch
          %1654 = sbr.rel (%p1652) target = $region48
        $region47: #{tpu_custom_call.1} parent=35 // pred_region
          %s1655 = smul.u32 2, %s22
          %s1657 = ssub.s32 256, 256
          %1658 = vsyncadd %s1648, %s1657
          %s1659 = smul.addr %s1655, 128
          %s1660 = scalar_lea.hbm %s4, %s1659
          %s1661 = sshll.u32 %s1651, 4
          %s1662 = int_to_ptr.vmem [resolvable:$true] %s1661
          %1667 = dma.vmem_to_hbm [thread:$0]  %s1662, 256, %s1660, %s1648, 128, 128, 8
        $region48: #{tpu_custom_call.1} parent=35 // pred_fallthru
          _
      $region36: #{tpu_custom_call.1} parent=5 // pred_fallthru
        _
      %p1668 = scmp.le.s32.totalorder 2, %s17
      // Predicated region
      $region49: #{tpu_custom_call.1} parent=5 // pred_check
        %p1669 = pneg %p1668
      $region50: #{tpu_custom_call.1} parent=5 // pred_check_branch
        %1671 = sbr.rel (%p1669) target = $region52
      $region51: #{tpu_custom_call.1} parent=5 // pred_region
        %s1672 = ssub.s32 %s17, 2
        // Predicated region
        $region53: #{tpu_custom_call.1} parent=51 // pred_check
          %p1673 = pneg %p135
        $region54: #{tpu_custom_call.1} parent=51 // pred_check_branch
          %1675 = sbr.rel (%p1673) target = $region56
        $region55: #{tpu_custom_call.1} parent=51 // pred_region
          %s1676 = sand.u32 %s120, 1
          %s1677 = scalar_lea.sflag [#allocation4], %s1676
          %s1678 = sand.u32 %s120, 1
          %s1679 = smul.addr %s1678, 16
          %s1680 = scalar_lea.vmem [#allocation7], %s1679
          %1681 = dma.done %s1677, 256
        $region56: #{tpu_custom_call.1} parent=51 // pred_fallthru
          _
      $region52: #{tpu_custom_call.1} parent=5 // pred_fallthru
        _
    $region6: #{tpu_custom_call.1} parent=1 // loop_footer
      %s21 = sadd.s32 1, %s17
    $region7: #{tpu_custom_call.1} parent=1 // loop_footer_branch
      %16 = sbr.rel target = $region3
    $region8: #{tpu_custom_call.1} parent=1 // loop_exit
      _
    %1682 = vsyncpa [#allocation3], 1
    %s1683 = scalar_lea.sflag [#allocation3], 1
    %1684 = vsyncpa %s1683, 1
    %1685 = vsyncpa [#allocation6], 1
    %1686 = vsyncpa [#allocation4], 1
    %s1687 = scalar_lea.sflag [#allocation4], 1
    %1688 = vsyncpa %s1687, 1

</llo_original>
